<compile_context>
chip_gen: v6e
topology: v6e:2x2x1
jax: 0.10.0
libtpu: 0.0.40
codegen_flags: <defaults>
</compile_context>

<pallas_src>
import functools

import jax
import jax.numpy as jnp
from jax.experimental import pallas as pl
from jax.experimental.pallas import tpu as pltpu


# --------------------------------- helpers ---------------------------------------
def _round_up(x, m):
    return ((x + m - 1) // m) * m


def _tpu_generation():
    try:
        kind = jax.devices()[0].device_kind.lower()
    except Exception:
        return None
    for g in (7, 6, 5, 4, 3):
        if f"v{g}" in kind:
            return g
    return None


def prepare_mlp_params(params):
    """Hoist the f32->bf16 weight casts out of the per-call path (do this once)."""
    C, M = params["w1"].shape
    return dict(
        w1=params["w1"].astype(jnp.bfloat16),
        w2=params["w2"].astype(jnp.bfloat16),
        b1=params["b1"].reshape(1, M).astype(jnp.float32),
        b2=params["b2"].reshape(1, C).astype(jnp.float32),
    )


# ------------------------- fused kernel: resident weights ------------------------
def _mlp_kernel_resident(x_ref, w1_ref, b1_ref, w2_ref, b2_ref, o_ref, *,
                         ew_dtype, approximate):
    x = x_ref[...].astype(jnp.bfloat16)                                    # (tm, C)
    h = jnp.dot(x, w1_ref[...], preferred_element_type=jnp.float32)        # (tm, M) f32 acc
    h = h.astype(ew_dtype) + b1_ref[...].astype(ew_dtype)
    h = jax.nn.gelu(h, approximate=approximate)                            # EUP transcendental
    y = jnp.dot(h.astype(jnp.bfloat16), w2_ref[...],
                preferred_element_type=jnp.float32)                        # (tm, C) f32 acc
    o_ref[...] = (y + b2_ref[...]).astype(o_ref.dtype)


# --------------------- fused kernel: hidden-dim (mlp_dim) tiled -------------------
def _mlp_kernel_ktiled(x_ref, w1_ref, b1_ref, w2_ref, b2_ref, o_ref, acc_ref, *,
                       ew_dtype, approximate):
    k = pl.program_id(1)

    @pl.when(k == 0)
    def _():
        acc_ref[...] = jnp.zeros_like(acc_ref)

    x = x_ref[...].astype(jnp.bfloat16)                                    # (tm, C)
    h = jnp.dot(x, w1_ref[...], preferred_element_type=jnp.float32)        # (tm, tk)
    h = h.astype(ew_dtype) + b1_ref[...].astype(ew_dtype)
    h = jax.nn.gelu(h, approximate=approximate)
    acc_ref[...] += jnp.dot(h.astype(jnp.bfloat16), w2_ref[...],
                            preferred_element_type=jnp.float32)            # (tm, C)

    @pl.when(k == pl.num_programs(1) - 1)
    def _():
        o_ref[...] = (acc_ref[...] + b2_ref[...]).astype(o_ref.dtype)


# ----------------------------------- wrapper --------------------------------------
def mlp_block_forward(x, params, *, tm=512, exact_gelu=False):
    *lead, C = x.shape
    M = params["w1"].shape[1]
    assert params["w1"].shape == (C, M) and params["w2"].shape == (M, C)
    assert C % 128 == 0 and M % 128 == 0, "feature dims must be lane-aligned"

    xt = x.reshape(-1, C)                          # lane-dense token slab
    N = xt.shape[0]
    itemsize = x.dtype.itemsize

    gen = _tpu_generation()
    # bf16 elementwise (bias-add + GELU) only where the VPU/EUP natively support it.
    ew_dtype = jnp.bfloat16 if gen in (6, 7) else jnp.float32

    # Token tile: don't exceed N, keep >= 2 grid steps (v7x 2 TCs shard the parallel axis).
    tm = min(tm, _round_up(N, 8))
    if pl.cdiv(N, tm) < 2 and N > 8:
        tm = _round_up(pl.cdiv(N, 2), 8)
    n_tiles = pl.cdiv(N, tm)

    w1 = params["w1"].astype(jnp.bfloat16)         # no-op if prepare_mlp_params was used
    w2 = params["w2"].astype(jnp.bfloat16)
    b1 = params["b1"].reshape(1, M).astype(jnp.float32)
    b2 = params["b2"].reshape(1, C).astype(jnp.float32)

    approximate = not exact_gelu

    weight_bytes = 2 * C * M * 2                   # bf16, single-buffered
    io_bytes = 2 * (tm * C * itemsize) * 2         # x + out tiles, double-buffered
    resident_need = weight_bytes + io_bytes + tm * M * 4 + (M + C) * 4

    physical_vmem = (64 << 20) if gen == 7 else (128 << 20)
    use_ktiled = resident_need > int(0.6 * physical_vmem)

    cost = pl.CostEstimate(
        flops=4 * N * C * M,
        transcendentals=N * M,
        bytes_accessed=2 * N * C * itemsize + weight_bytes + (M + C) * 4,
    )
    vmem_cap = (56 << 20) if gen == 7 else (100 << 20)

    if not use_ktiled:
        vmem_limit = min(vmem_cap, max(32 << 20, int(1.5 * resident_need)))
        kernel = functools.partial(_mlp_kernel_resident,
                                   ew_dtype=ew_dtype, approximate=approximate)
        out = pl.pallas_call(
            kernel,
            out_shape=jax.ShapeDtypeStruct((N, C), x.dtype),
            grid_spec=pltpu.PrefetchScalarGridSpec(
                num_scalar_prefetch=0,
                grid=(n_tiles,),
                in_specs=[
                    pl.BlockSpec((tm, C), lambda i: (i, 0)),                       # token tile
                    pl.BlockSpec((C, M), lambda i: (0, 0),
                                 pipeline_mode=pl.Buffered(1)),                    # lin1 W
                    pl.BlockSpec((1, M), lambda i: (0, 0),
                                 pipeline_mode=pl.Buffered(1)),                    # lin1 b
                    pl.BlockSpec((M, C), lambda i: (0, 0),
                                 pipeline_mode=pl.Buffered(1)),                    # lin2 W
                    pl.BlockSpec((1, C), lambda i: (0, 0),
                                 pipeline_mode=pl.Buffered(1)),                    # lin2 b
                ],
                out_specs=pl.BlockSpec((tm, C), lambda i: (i, 0)),
            ),
            compiler_params=pltpu.CompilerParams(
                dimension_semantics=("parallel",),
                vmem_limit_bytes=vmem_limit,
            ),
            cost_estimate=cost,
        )(xt, w1, b1, w2, b2)
    else:
        # Hidden-dim tiling bounds weight VMEM regardless of mlp_dim (v7x / huge mlp_dim).
        tk = next(t for t in (2048, 1024, 512, 256, 128) if M % t == 0)
        ktiled_need = (io_bytes + tm * C * 4 + 2 * (2 * C * tk * 2)
                       + 2 * tk * 4 + C * 4 + tm * tk * 4)
        vmem_limit = min(vmem_cap, max(32 << 20, int(1.5 * ktiled_need)))
        kernel = functools.partial(_mlp_kernel_ktiled,
                                   ew_dtype=ew_dtype, approximate=approximate)
        out = pl.pallas_call(
            kernel,
            out_shape=jax.ShapeDtypeStruct((N, C), x.dtype),
            grid_spec=pltpu.PrefetchScalarGridSpec(
                num_scalar_prefetch=0,
                grid=(n_tiles, M // tk),
                in_specs=[
                    pl.BlockSpec((tm, C), lambda i, k: (i, 0)),                    # token tile
                    pl.BlockSpec((C, tk), lambda i, k: (0, k)),                    # lin1 W slice
                    pl.BlockSpec((1, tk), lambda i, k: (0, k)),                    # lin1 b slice
                    pl.BlockSpec((tk, C), lambda i, k: (k, 0)),                    # lin2 W slice
                    pl.BlockSpec((1, C), lambda i, k: (0, 0),
                                 pipeline_mode=pl.Buffered(1)),                    # lin2 b
                ],
                out_specs=pl.BlockSpec((tm, C), lambda i, k: (i, 0)),
                scratch_shapes=[pltpu.VMEM((tm, C), jnp.float32)],                 # f32 acc
            ),
            compiler_params=pltpu.CompilerParams(
                dimension_semantics=("parallel", "arbitrary"),
                vmem_limit_bytes=vmem_limit,
            ),
            cost_estimate=cost,
        )(xt, w1, b1, w2, b2)

    return out.reshape(*lead, C)


# ------------------------------ pure-JAX reference --------------------------------
def mlp_block_reference(x, params):
    # Matches torch: lin2(GELU(lin1(x))) with exact (erf) GELU, f32 throughout.
    h = jax.nn.gelu(x @ params["w1"] + params["b1"], approximate=False)
    return h @ params["w2"] + params["b2"]


if __name__ == "__main__":
    # MLPBlock has no hard-coded dims; small TPU-friendly ones, tokens laid out (B, H, W, C)
    # like SAM's ViT usage.
    B, H, W = 2, 16, 16
    C, M = 256, 512                       # embedding_dim=256, mlp_dim=512

    key = jax.random.PRNGKey(0)
    keys = jax.random.split(key, 5)

    x = jax.random.normal(keys[0], (B, H, W, C), jnp.float32)
    params = dict(
        w1=0.02 * jax.random.normal(keys[1], (C, M), jnp.float32),
        b1=0.01 * jax.random.normal(keys[2], (M,), jnp.float32),
        w2=0.02 * jax.random.normal(keys[3], (M, C), jnp.float32),
        b2=0.01 * jax.random.normal(keys[4], (C,), jnp.float32),
    )

    prepared = prepare_mlp_params(params)         # one-time bf16 weight cast (hoisted)

    out = mlp_block_forward(x, prepared)
    out = jax.block_until_ready(out)

    ref = mlp_block_reference(x, params)
    assert out.shape == x.shape and out.dtype == x.dtype
    max_err = float(jnp.max(jnp.abs(out - ref)))
    assert max_err < 1e-2, f"mismatch vs reference: max_err={max_err}"

    print("KERNEL_OK")
</pallas_src>

<mosaic_0001>
module attributes {stable_mosaic.version = 11 : i64} {
  func.func @_mlp_kernel_resident(%arg0: i32, %arg1: memref<256x256xf32, #tpu.memory_space<vmem>>, %arg2: memref<256x512xbf16, #tpu.memory_space<vmem>>, %arg3: memref<1x512xf32, #tpu.memory_space<vmem>>, %arg4: memref<512x256xbf16, #tpu.memory_space<vmem>>, %arg5: memref<1x256xf32, #tpu.memory_space<vmem>>, %arg6: memref<256x256xf32, #tpu.memory_space<vmem>>) attributes {dimension_semantics = [#tpu.dimension_semantics<parallel>], iteration_bounds = array<i64: 2>, scalar_prefetch = 0 : i64, scratch_operands = 0 : i64, tpu.core_type = #tpu.core_type<tc>, window_params = [{transform_indices = @transform_0, window_bounds = array<i64: 256, 256>}, {pipeline_mode = #tpu.pipeline_mode<synchronous>, transform_indices = @transform_1, window_bounds = array<i64: 256, 512>}, {pipeline_mode = #tpu.pipeline_mode<synchronous>, transform_indices = @transform_2, window_bounds = array<i64: 1, 512>}, {pipeline_mode = #tpu.pipeline_mode<synchronous>, transform_indices = @transform_3, window_bounds = array<i64: 512, 256>}, {pipeline_mode = #tpu.pipeline_mode<synchronous>, transform_indices = @transform_4, window_bounds = array<i64: 1, 256>}, {transform_indices = @transform_5, window_bounds = array<i64: 256, 256>}]} {
    %c0 = arith.constant 0 : index
    %c0_0 = arith.constant 0 : index
    %0 = vector.load %arg1[%c0, %c0_0] : memref<256x256xf32, #tpu.memory_space<vmem>>, vector<256x256xf32>
    %1 = arith.truncf %0 : vector<256x256xf32> to vector<256x256xbf16>
    %c0_1 = arith.constant 0 : index
    %c0_2 = arith.constant 0 : index
    %2 = vector.load %arg2[%c0_1, %c0_2] : memref<256x512xbf16, #tpu.memory_space<vmem>>, vector<256x512xbf16>
    %cst = arith.constant dense<0.000000e+00> : vector<256x512xf32>
    %3 = tpu.matmul %1, %2, %cst {dimension_numbers = #tpu.dot_dimension_numbers<[1], [0], [0], [1], [0, 0, 1, 1], [], []>} : vector<256x256xbf16>, vector<256x512xbf16>, vector<256x512xf32> -> vector<256x512xf32>
    %c0_3 = arith.constant 0 : index
    %c0_4 = arith.constant 0 : index
    %4 = vector.load %arg3[%c0_3, %c0_4] : memref<1x512xf32, #tpu.memory_space<vmem>>, vector<1x512xf32>
    %5 = vector.broadcast %4 : vector<1x512xf32> to vector<256x512xf32>
    %6 = arith.addf %3, %5 : vector<256x512xf32>
    %7 = arith.mulf %6, %6 : vector<256x512xf32>
    %8 = arith.mulf %6, %7 : vector<256x512xf32>
    %cst_5 = arith.constant 4.471500e-02 : f32
    %9 = vector.broadcast %cst_5 : f32 to vector<256x512xf32>
    %10 = arith.mulf %9, %8 : vector<256x512xf32>
    %11 = arith.addf %6, %10 : vector<256x512xf32>
    %cst_6 = arith.constant 0.797884583 : f32
    %12 = vector.broadcast %cst_6 : f32 to vector<256x512xf32>
    %13 = arith.mulf %12, %11 : vector<256x512xf32>
    %14 = math.tanh %13 : vector<256x512xf32>
    %cst_7 = arith.constant 1.000000e+00 : f32
    %15 = vector.broadcast %cst_7 : f32 to vector<256x512xf32>
    %16 = arith.addf %15, %14 : vector<256x512xf32>
    %cst_8 = arith.constant 5.000000e-01 : f32
    %17 = vector.broadcast %cst_8 : f32 to vector<256x512xf32>
    %18 = arith.mulf %17, %16 : vector<256x512xf32>
    %19 = arith.mulf %6, %18 : vector<256x512xf32>
    %20 = arith.truncf %19 : vector<256x512xf32> to vector<256x512xbf16>
    %c0_9 = arith.constant 0 : index
    %c0_10 = arith.constant 0 : index
    %21 = vector.load %arg4[%c0_9, %c0_10] : memref<512x256xbf16, #tpu.memory_space<vmem>>, vector<512x256xbf16>
    %cst_11 = arith.constant dense<0.000000e+00> : vector<256x256xf32>
    %22 = tpu.matmul %20, %21, %cst_11 {dimension_numbers = #tpu.dot_dimension_numbers<[1], [0], [0], [1], [0, 0, 1, 1], [], []>} : vector<256x512xbf16>, vector<512x256xbf16>, vector<256x256xf32> -> vector<256x256xf32>
    %c0_12 = arith.constant 0 : index
    %c0_13 = arith.constant 0 : index
    %23 = vector.load %arg5[%c0_12, %c0_13] : memref<1x256xf32, #tpu.memory_space<vmem>>, vector<1x256xf32>
    %24 = vector.broadcast %23 : vector<1x256xf32> to vector<256x256xf32>
    %25 = arith.addf %22, %24 : vector<256x256xf32>
    %c0_14 = arith.constant 0 : index
    %c0_15 = arith.constant 0 : index
    %26 = vector.load %arg6[%c0_14, %c0_15] : memref<256x256xf32, #tpu.memory_space<vmem>>, vector<256x256xf32>
    tpu.vector_store %arg6[%c0_14, %c0_15], %25 {strides = array<i32>} : memref<256x256xf32, #tpu.memory_space<vmem>>, vector<256x256xf32>,
    return
  }
  func.func @transform_0(%arg0: i32) -> (i32, i32) {
    %c0_i32 = arith.constant 0 : i32
    %c0_i32_0 = arith.constant 0 : i32
    return %arg0, %c0_i32 : i32, i32
  }
  func.func @transform_1(%arg0: i32) -> (i32, i32) {
    %c0_i32 = arith.constant 0 : i32
    %c0_i32_0 = arith.constant 0 : i32
    %c0_i32_1 = arith.constant 0 : i32
    return %c0_i32, %c0_i32_0 : i32, i32
  }
  func.func @transform_2(%arg0: i32) -> (i32, i32) {
    %c0_i32 = arith.constant 0 : i32
    %c0_i32_0 = arith.constant 0 : i32
    %c0_i32_1 = arith.constant 0 : i32
    return %c0_i32, %c0_i32_0 : i32, i32
  }
  func.func @transform_3(%arg0: i32) -> (i32, i32) {
    %c0_i32 = arith.constant 0 : i32
    %c0_i32_0 = arith.constant 0 : i32
    %c0_i32_1 = arith.constant 0 : i32
    return %c0_i32, %c0_i32_0 : i32, i32
  }
  func.func @transform_4(%arg0: i32) -> (i32, i32) {
    %c0_i32 = arith.constant 0 : i32
    %c0_i32_0 = arith.constant 0 : i32
    %c0_i32_1 = arith.constant 0 : i32
    return %c0_i32, %c0_i32_0 : i32, i32
  }
  func.func @transform_5(%arg0: i32) -> (i32, i32) {
    %c0_i32 = arith.constant 0 : i32
    %c0_i32_0 = arith.constant 0 : i32
    return %arg0, %c0_i32 : i32, i32
  }
}

</mosaic_0001>

<llo_original>
// kernel: tpu_custom_call.1
$region0: #{tpu_custom_call.1}
  #allocation0 [shape = 'u32[]', space=smem, size = 0x4, offset = 0x4, fixed_abs, tag = 'smem constant byte address 0x4 - core index']
  #allocation1 [shape = 'u32[144,128]{1,0:T(1,128)}', space=vmem, size = 0x12000, scoped, tag = 'internal scratch']
  %s0 = inlined_call_operand.hbm [shape: f32[512,256], index: 0, kind: input, shape index: {}]
  %s1 = inlined_call_operand.hbm [shape: bf16[256,512], index: 1, kind: input, shape index: {}]
  %s2 = inlined_call_operand.hbm [shape: f32[1,512], index: 2, kind: input, shape index: {}]
  %s3 = inlined_call_operand.hbm [shape: bf16[512,256], index: 3, kind: input, shape index: {}]
  %s4 = inlined_call_operand.vmem [shape: f32[1,256], index: 4, kind: input, shape index: {}]
  %s5 = inlined_call_operand.hbm [shape: f32[512,256], index: 5, kind: output, shape index: {}]
  %s6 = sld [smem:[#allocation0]]
  $region69: #{tpu_custom_call.1} parent=0
    _
  %s8 = ssub.s32 1, %s6
  %s9 = scalar_select 0, %s8, %s6
  $region1: #{tpu_custom_call.1} parent=0
    #allocation2 [shape = 'u8[524288]{0}', space=vmem, size = 0x80000, scoped, tag = 'input window, operand 0']
    #allocation3 [shape = 's32[2]{0}', space=sflag, size = 0x8, scoped, tag = 'scoped memory for tpu_custom_call.1']
    #allocation4 [shape = 's32[2]{0}', space=sflag, size = 0x8, scoped, tag = 'scoped memory for tpu_custom_call.1']
    #allocation5 [shape = 'u8[262144]{0}', space=vmem, size = 0x40000, scoped, tag = 'input window, operand 1, single buffered']
    #allocation6 [shape = 's32[1]{0}', space=sflag, size = 0x4, scoped, tag = 'scoped memory for tpu_custom_call.1']
    #allocation7 [shape = 'u8[2048]{0}', space=vmem, size = 0x800, scoped, tag = 'input window, operand 2, single buffered']
    #allocation8 [shape = 'u8[262144]{0}', space=vmem, size = 0x40000, scoped, tag = 'input window, operand 3, single buffered']
    #allocation9 [shape = 's32[1]{0}', space=sflag, size = 0x4, scoped, tag = 'scoped memory for tpu_custom_call.1']
    #allocation10 [shape = 'u8[524288]{0}', space=vmem, size = 0x80000, scoped, tag = 'output window, operand 0']
    %10 = vsyncpa [#allocation3], 0
    %s11 = scalar_lea.sflag [#allocation3], 1
    %12 = vsyncpa %s11, 0
    %13 = vsyncpa [#allocation6], 0
    %14 = vsyncpa [#allocation9], 0
    %15 = vsyncpa [#allocation4], 0
    %s16 = scalar_lea.sflag [#allocation4], 1
    %17 = vsyncpa %s16, 0
    loop: start=0, step=1, limit=4
    $region2: #{tpu_custom_call.1} parent=1 // loop_pre_header
      _
    $region3: #{tpu_custom_call.1} parent=1 // loop_header
      %s19 = sphi 0, %s23
      %p20 = scmp.ge.s32.totalorder %s19, 4
      %s29 = sphi 0, %s31
      %s32 = sphi 0, %s29
      %s33 = sphi 0, %s32
      %s49 = sphi 0, %s33
      %s53 = sphi 0, %s53
      %s55 = sphi 0, %s53
      %s56 = sphi 0, %s55
      %s70 = sphi 0, %s56
      %s74 = sphi 0, %s74
      %s76 = sphi 0, %s74
      %s77 = sphi 0, %s76
      %s91 = sphi 0, %s77
      %s95 = sphi 0, %s95
      %s97 = sphi 0, %s95
      %s98 = sphi 0, %s97
      %s112 = sphi 0, %s98
      %s116 = sphi 0, %s116
      %s118 = sphi 0, %s116
      %s119 = sphi 0, %s118
      %s133 = sphi 0, %s119
      %s139 = sphi 0, %s141
      %s142 = sphi 0, %s139
      %s143 = sphi 0, %s142
      %s159 = sphi 0, %s143
    $region4: #{tpu_custom_call.1} parent=1 // loop_header_branch
      %22 = sbr.rel (%p20) target = $region8
    $region5: #{tpu_custom_call.1} parent=1 // loop_body
      %s24 = ssub.s32 %s19, 1
      %s25 = ssub.s32 %s19, 2
      %s26 = sadd.s32 %s19, 1
      %s27 = ssub.s32 %s19, %s26
      %p28 = scmp.eq.s32.totalorder %s27, 0
      %s30 = sadd.s32 %s29, 1
      %s31 = scalar_select %p28, %s29, %s30
      %p34 = pneg %p28
      %p35 = scmp.eq.s32.totalorder %s19, 1
      %p36 = por %p34, %p35
      %p37 = scmp.ne.s32.totalorder %s29, %s32
      %p38 = scmp.eq.s32.totalorder %s19, 0
      %p39 = por %p37, %p38
      %p40 = scmp.ne.s32.totalorder %s29, %s32
      %p41 = scmp.eq.s32.totalorder %s24, 1
      %p42 = por %p40, %p41
      %p43 = scmp.ne.s32.totalorder %s32, %s33
      %p44 = scmp.eq.s32.totalorder %s24, 0
      %p45 = por %p43, %p44
      %p46 = scmp.ne.s32.totalorder %s32, %s33
      %p47 = scmp.eq.s32.totalorder %s25, 1
      %p48 = por %p46, %p47
      %p50 = scmp.ne.s32.totalorder %s33, %s49
      %p51 = scmp.eq.s32.totalorder %s25, 0
      %p52 = por %p50, %p51
      %s54 = sadd.s32 %s53, 1
      %p57 = scmp.eq.s32.totalorder %s19, 1
      %p58 = scmp.ne.s32.totalorder %s53, %s55
      %p59 = scmp.eq.s32.totalorder %s19, 0
      %p60 = por %p58, %p59
      %p61 = scmp.ne.s32.totalorder %s53, %s55
      %p62 = scmp.eq.s32.totalorder %s24, 1
      %p63 = por %p61, %p62
      %p64 = scmp.ne.s32.totalorder %s55, %s56
      %p65 = scmp.eq.s32.totalorder %s24, 0
      %p66 = por %p64, %p65
      %p67 = scmp.ne.s32.totalorder %s55, %s56
      %p68 = scmp.eq.s32.totalorder %s25, 1
      %p69 = por %p67, %p68
      %p71 = scmp.ne.s32.totalorder %s56, %s70
      %p72 = scmp.eq.s32.totalorder %s25, 0
      %p73 = por %p71, %p72
      %s75 = sadd.s32 %s74, 1
      %p78 = scmp.eq.s32.totalorder %s19, 1
      %p79 = scmp.ne.s32.totalorder %s74, %s76
      %p80 = scmp.eq.s32.totalorder %s19, 0
      %p81 = por %p79, %p80
      %p82 = scmp.ne.s32.totalorder %s74, %s76
      %p83 = scmp.eq.s32.totalorder %s24, 1
      %p84 = por %p82, %p83
      %p85 = scmp.ne.s32.totalorder %s76, %s77
      %p86 = scmp.eq.s32.totalorder %s24, 0
      %p87 = por %p85, %p86
      %p88 = scmp.ne.s32.totalorder %s76, %s77
      %p89 = scmp.eq.s32.totalorder %s25, 1
      %p90 = por %p88, %p89
      %p92 = scmp.ne.s32.totalorder %s77, %s91
      %p93 = scmp.eq.s32.totalorder %s25, 0
      %p94 = por %p92, %p93
      %s96 = sadd.s32 %s95, 1
      %p99 = scmp.eq.s32.totalorder %s19, 1
      %p100 = scmp.ne.s32.totalorder %s95, %s97
      %p101 = scmp.eq.s32.totalorder %s19, 0
      %p102 = por %p100, %p101
      %p103 = scmp.ne.s32.totalorder %s95, %s97
      %p104 = scmp.eq.s32.totalorder %s24, 1
      %p105 = por %p103, %p104
      %p106 = scmp.ne.s32.totalorder %s97, %s98
      %p107 = scmp.eq.s32.totalorder %s24, 0
      %p108 = por %p106, %p107
      %p109 = scmp.ne.s32.totalorder %s97, %s98
      %p110 = scmp.eq.s32.totalorder %s25, 1
      %p111 = por %p109, %p110
      %p113 = scmp.ne.s32.totalorder %s98, %s112
      %p114 = scmp.eq.s32.totalorder %s25, 0
      %p115 = por %p113, %p114
      %s117 = sadd.s32 %s116, 1
      %p120 = scmp.eq.s32.totalorder %s19, 1
      %p121 = scmp.ne.s32.totalorder %s116, %s118
      %p122 = scmp.eq.s32.totalorder %s19, 0
      %p123 = por %p121, %p122
      %p124 = scmp.ne.s32.totalorder %s116, %s118
      %p125 = scmp.eq.s32.totalorder %s24, 1
      %p126 = por %p124, %p125
      %p127 = scmp.ne.s32.totalorder %s118, %s119
      %p128 = scmp.eq.s32.totalorder %s24, 0
      %p129 = por %p127, %p128
      %p130 = scmp.ne.s32.totalorder %s118, %s119
      %p131 = scmp.eq.s32.totalorder %s25, 1
      %p132 = por %p130, %p131
      %p134 = scmp.ne.s32.totalorder %s119, %s133
      %p135 = scmp.eq.s32.totalorder %s25, 0
      %p136 = por %p134, %p135
      %s137 = ssub.s32 %s19, %s26
      %p138 = scmp.eq.s32.totalorder %s137, 0
      %s140 = sadd.s32 %s139, 1
      %s141 = scalar_select %p138, %s139, %s140
      %p144 = pneg %p138
      %p145 = scmp.eq.s32.totalorder %s19, 1
      %p146 = por %p144, %p145
      %p147 = scmp.ne.s32.totalorder %s139, %s142
      %p148 = scmp.eq.s32.totalorder %s19, 0
      %p149 = por %p147, %p148
      %p150 = scmp.ne.s32.totalorder %s139, %s142
      %p151 = scmp.eq.s32.totalorder %s24, 1
      %p152 = por %p150, %p151
      %p153 = scmp.ne.s32.totalorder %s142, %s143
      %p154 = scmp.eq.s32.totalorder %s24, 0
      %p155 = por %p153, %p154
      %p156 = scmp.ne.s32.totalorder %s142, %s143
      %p157 = scmp.eq.s32.totalorder %s25, 1
      %p158 = por %p156, %p157
      %p160 = scmp.ne.s32.totalorder %s143, %s159
      %p161 = scmp.eq.s32.totalorder %s25, 0
      %p162 = por %p160, %p161
      %p163 = scmp.le.s32.totalorder 1, %s19
      %p164 = scmp.lt.s32.totalorder %s19, 3
      %p165 = pnand %p163, %p164
      %p166 = pneg %p165
      // Predicated region
      $region9: #{tpu_custom_call.1} parent=5 // pred_check
        _
      $region10: #{tpu_custom_call.1} parent=5 // pred_check_branch
        %168 = sbr.rel (%p165) target = $region12
      $region11: #{tpu_custom_call.1} parent=5 // pred_region
        %s169 = ssub.s32 %s19, 1
        // Predicated region
        $region13: #{tpu_custom_call.1} parent=11 // pred_check
          %p170 = pneg %p66
        $region14: #{tpu_custom_call.1} parent=11 // pred_check_branch
          %172 = sbr.rel (%p170) target = $region16
        $region15: #{tpu_custom_call.1} parent=11 // pred_region
          %s174 = ssub.s32 8192, 8192
          %175 = vsyncadd [#allocation6], %s174
          %s176 = sshll.u32 [#allocation5], 4
          %s177 = int_to_ptr.vmem [resolvable:$true] %s176
          %182 = dma.hbm_to_vmem [thread:$0]  %s1, 8192, %s177, [#allocation6], 256, 256, 16
        $region16: #{tpu_custom_call.1} parent=11 // pred_fallthru
          _
        // Predicated region
        $region17: #{tpu_custom_call.1} parent=11 // pred_check
          %p183 = pneg %p87
        $region18: #{tpu_custom_call.1} parent=11 // pred_check_branch
          %185 = sbr.rel (%p183) target = $region20
        $region19: #{tpu_custom_call.1} parent=11 // pred_region
          %s187 = ssub.s32 64, 64
          %188 = vsyncadd [#allocation6], %s187
          %s190 = sshll.u32 [#allocation7], 4
          %s191 = int_to_ptr.vmem [resolvable:$true] %s190
          %193 = dma.hbm_to_vmem [thread:$0]  %s2, 64, %s191, [#allocation6]
        $region20: #{tpu_custom_call.1} parent=11 // pred_fallthru
          _
        // Predicated region
        $region21: #{tpu_custom_call.1} parent=11 // pred_check
          %p194 = pneg %p108
        $region22: #{tpu_custom_call.1} parent=11 // pred_check_branch
          %196 = sbr.rel (%p194) target = $region24
        $region23: #{tpu_custom_call.1} parent=11 // pred_region
          %s198 = ssub.s32 8192, 8192
          %199 = vsyncadd [#allocation9], %s198
          %s200 = sshll.u32 [#allocation8], 4
          %s201 = int_to_ptr.vmem [resolvable:$true] %s200
          %206 = dma.hbm_to_vmem [thread:$0]  %s3, 8192, %s201, [#allocation9], 128, 128, 8
        $region24: #{tpu_custom_call.1} parent=11 // pred_fallthru
          _
        // Predicated region
        $region25: #{tpu_custom_call.1} parent=11 // pred_check
          %p207 = pneg %p129
        $region26: #{tpu_custom_call.1} parent=11 // pred_check_branch
          %209 = sbr.rel (%p207) target = $region28
        $region27: #{tpu_custom_call.1} parent=11 // pred_region
          _
        $region28: #{tpu_custom_call.1} parent=11 // pred_fallthru
          _
      $region12: #{tpu_custom_call.1} parent=5 // pred_fallthru
        _
      %p210 = scmp.lt.s32.totalorder %s19, 2
      // Predicated region
      $region29: #{tpu_custom_call.1} parent=5 // pred_check
        %p211 = pneg %p210
      $region30: #{tpu_custom_call.1} parent=5 // pred_check_branch
        %213 = sbr.rel (%p211) target = $region32
      $region31: #{tpu_custom_call.1} parent=5 // pred_region
        // Predicated region
        $region33: #{tpu_custom_call.1} parent=31 // pred_check
          %p214 = pneg %p39
        $region34: #{tpu_custom_call.1} parent=31 // pred_check_branch
          %216 = sbr.rel (%p214) target = $region36
        $region35: #{tpu_custom_call.1} parent=31 // pred_region
          %s217 = sand.u32 %s29, 1
          %s218 = scalar_lea.sflag [#allocation3], %s217
          %s219 = sand.u32 %s29, 1
          %s220 = smul.addr %s219, 512
          %s221 = scalar_lea.vmem [#allocation2], %s220
          %s222 = smul.u32 32, %s19
          %s224 = ssub.s32 8192, 8192
          %225 = vsyncadd %s218, %s224
          %s226 = smul.addr %s222, 2
          %s227 = smul.addr %s226, 128
          %s228 = scalar_lea.hbm %s0, %s227
          %s229 = sshll.u32 %s221, 4
          %s230 = int_to_ptr.vmem [resolvable:$true] %s229
          %235 = dma.hbm_to_vmem [thread:$0]  %s228, 8192, %s230, %s218, 256, 256, 16
        $region36: #{tpu_custom_call.1} parent=31 // pred_fallthru
          _
      $region32: #{tpu_custom_call.1} parent=5 // pred_fallthru
        _
      %p236 = scmp.le.s32.totalorder 1, %s19
      %p237 = scmp.lt.s32.totalorder %s19, 3
      %p238 = pnand %p236, %p237
      %p239 = pneg %p238
      // Predicated region
      $region37: #{tpu_custom_call.1} parent=5 // pred_check
        _
      $region38: #{tpu_custom_call.1} parent=5 // pred_check_branch
        %241 = sbr.rel (%p238) target = $region40
      $region39: #{tpu_custom_call.1} parent=5 // pred_region
        %s242 = ssub.s32 %s19, 1
        %s243 = sand.u32 %s32, 1
        %s244 = scalar_lea.sflag [#allocation3], %s243
        %s245 = sand.u32 %s32, 1
        %s246 = smul.addr %s245, 512
        %s247 = scalar_lea.vmem [#allocation2], %s246
        // Predicated region
        $region41: #{tpu_custom_call.1} parent=39 // pred_check
          %p248 = pneg %p45
        $region42: #{tpu_custom_call.1} parent=39 // pred_check_branch
          %250 = sbr.rel (%p248) target = $region44
        $region43: #{tpu_custom_call.1} parent=39 // pred_region
          %251 = dma.done %s244, 8192
        $region44: #{tpu_custom_call.1} parent=39 // pred_fallthru
          _
        // Predicated region
        $region45: #{tpu_custom_call.1} parent=39 // pred_check
          %p252 = pneg %p66
        $region46: #{tpu_custom_call.1} parent=39 // pred_check_branch
          %254 = sbr.rel (%p252) target = $region48
        $region47: #{tpu_custom_call.1} parent=39 // pred_region
          %255 = dma.done [#allocation6], 8192
        $region48: #{tpu_custom_call.1} parent=39 // pred_fallthru
          _
        // Predicated region
        $region49: #{tpu_custom_call.1} parent=39 // pred_check
          %p256 = pneg %p87
        $region50: #{tpu_custom_call.1} parent=39 // pred_check_branch
          %258 = sbr.rel (%p256) target = $region52
        $region51: #{tpu_custom_call.1} parent=39 // pred_region
          %259 = dma.done [#allocation6], 64
        $region52: #{tpu_custom_call.1} parent=39 // pred_fallthru
          _
        // Predicated region
        $region53: #{tpu_custom_call.1} parent=39 // pred_check
          %p260 = pneg %p108
        $region54: #{tpu_custom_call.1} parent=39 // pred_check_branch
          %262 = sbr.rel (%p260) target = $region56
        $region55: #{tpu_custom_call.1} parent=39 // pred_region
          %263 = dma.done [#allocation9], 8192
        $region56: #{tpu_custom_call.1} parent=39 // pred_fallthru
          _
        %s264 = sand.u32 %s32, 1
        %s265 = scalar_lea.sflag [#allocation3], %s264
        %s266 = sand.u32 %s32, 1
        %s267 = smul.addr %s266, 512
        %s268 = scalar_lea.vmem [#allocation2], %s267
        %p269 = pneg %p45
        %p270 = pneg %p42
        %p271 = pneg %p66
        %p272 = pneg %p63
        %p273 = pneg %p87
        %p274 = pneg %p84
        %p275 = pneg %p108
        %p276 = pneg %p105
        %p277 = pneg %p129
        %p278 = pneg %p126
        %p279 = pneg %p155
        %p280 = pneg %p152
        %s281 = sand.u32 %s142, 1
        %s282 = scalar_lea.sflag [#allocation4], %s281
        %s283 = sand.u32 %s142, 1
        %s284 = smul.addr %s283, 512
        %s285 = scalar_lea.vmem [#allocation10], %s284
        %s286 = smul.u32 32, %s24
        %s287 = smul.u32 32, %s24
        %v288 = vld [vmem:[%s247] sm:$0xff]
        %v289 = vld [vmem:[%s247 + $0x8] sm:$0xff]
        %v290 = vld [vmem:[%s247 + $0x10] sm:$0xff]
        %v291 = vld [vmem:[%s247 + $0x18] sm:$0xff]
        %v292 = vld [vmem:[%s247 + $0x20] sm:$0xff]
        %v293 = vld [vmem:[%s247 + $0x28] sm:$0xff]
        %v294 = vld [vmem:[%s247 + $0x30] sm:$0xff]
        %v295 = vld [vmem:[%s247 + $0x38] sm:$0xff]
        %v296 = vld [vmem:[%s247 + $0x40] sm:$0xff]
        %v297 = vld [vmem:[%s247 + $0x48] sm:$0xff]
        %v298 = vld [vmem:[%s247 + $0x50] sm:$0xff]
        %v299 = vld [vmem:[%s247 + $0x58] sm:$0xff]
        %v300 = vld [vmem:[%s247 + $0x60] sm:$0xff]
        %v301 = vld [vmem:[%s247 + $0x68] sm:$0xff]
        %v302 = vld [vmem:[%s247 + $0x70] sm:$0xff]
        %v303 = vld [vmem:[%s247 + $0x78] sm:$0xff]
        %v304 = vld [vmem:[%s247 + $0x80] sm:$0xff]
        %v305 = vld [vmem:[%s247 + $0x88] sm:$0xff]
        %v306 = vld [vmem:[%s247 + $0x90] sm:$0xff]
        %v307 = vld [vmem:[%s247 + $0x98] sm:$0xff]
        %v308 = vld [vmem:[%s247 + $0xa0] sm:$0xff]
        %v309 = vld [vmem:[%s247 + $0xa8] sm:$0xff]
        %v310 = vld [vmem:[%s247 + $0xb0] sm:$0xff]
        %v311 = vld [vmem:[%s247 + $0xb8] sm:$0xff]
        %v312 = vld [vmem:[%s247 + $0xc0] sm:$0xff]
        %v313 = vld [vmem:[%s247 + $0xc8] sm:$0xff]
        %v314 = vld [vmem:[%s247 + $0xd0] sm:$0xff]
        %v315 = vld [vmem:[%s247 + $0xd8] sm:$0xff]
        %v316 = vld [vmem:[%s247 + $0xe0] sm:$0xff]
        %v317 = vld [vmem:[%s247 + $0xe8] sm:$0xff]
        %v318 = vld [vmem:[%s247 + $0xf0] sm:$0xff]
        %v319 = vld [vmem:[%s247 + $0xf8] sm:$0xff]
        %v320 = vld [vmem:[%s247 + $0x100] sm:$0xff]
        %v321 = vld [vmem:[%s247 + $0x108] sm:$0xff]
        %v322 = vld [vmem:[%s247 + $0x110] sm:$0xff]
        %v323 = vld [vmem:[%s247 + $0x118] sm:$0xff]
        %v324 = vld [vmem:[%s247 + $0x120] sm:$0xff]
        %v325 = vld [vmem:[%s247 + $0x128] sm:$0xff]
        %v326 = vld [vmem:[%s247 + $0x130] sm:$0xff]
        %v327 = vld [vmem:[%s247 + $0x138] sm:$0xff]
        %v328 = vld [vmem:[%s247 + $0x140] sm:$0xff]
        %v329 = vld [vmem:[%s247 + $0x148] sm:$0xff]
        %v330 = vld [vmem:[%s247 + $0x150] sm:$0xff]
        %v331 = vld [vmem:[%s247 + $0x158] sm:$0xff]
        %v332 = vld [vmem:[%s247 + $0x160] sm:$0xff]
        %v333 = vld [vmem:[%s247 + $0x168] sm:$0xff]
        %v334 = vld [vmem:[%s247 + $0x170] sm:$0xff]
        %v335 = vld [vmem:[%s247 + $0x178] sm:$0xff]
        %v336 = vld [vmem:[%s247 + $0x180] sm:$0xff]
        %v337 = vld [vmem:[%s247 + $0x188] sm:$0xff]
        %v338 = vld [vmem:[%s247 + $0x190] sm:$0xff]
        %v339 = vld [vmem:[%s247 + $0x198] sm:$0xff]
        %v340 = vld [vmem:[%s247 + $0x1a0] sm:$0xff]
        %v341 = vld [vmem:[%s247 + $0x1a8] sm:$0xff]
        %v342 = vld [vmem:[%s247 + $0x1b0] sm:$0xff]
        %v343 = vld [vmem:[%s247 + $0x1b8] sm:$0xff]
        %v344 = vld [vmem:[%s247 + $0x1c0] sm:$0xff]
        %v345 = vld [vmem:[%s247 + $0x1c8] sm:$0xff]
        %v346 = vld [vmem:[%s247 + $0x1d0] sm:$0xff]
        %v347 = vld [vmem:[%s247 + $0x1d8] sm:$0xff]
        %v348 = vld [vmem:[%s247 + $0x1e0] sm:$0xff]
        %v349 = vld [vmem:[%s247 + $0x1e8] sm:$0xff]
        %v350 = vld [vmem:[%s247 + $0x1f0] sm:$0xff]
        %v351 = vld [vmem:[%s247 + $0x1f8] sm:$0xff]
        %v352 = vpack.c.bf16 %v290, %v288
        %v353 = vpack.c.bf16 %v291, %v289
        %v354 = vpack.c.bf16 %v294, %v292
        %v355 = vpack.c.bf16 %v295, %v293
        %v356 = vpack.c.bf16 %v298, %v296
        %v357 = vpack.c.bf16 %v299, %v297
        %v358 = vpack.c.bf16 %v302, %v300
        %v359 = vpack.c.bf16 %v303, %v301
        %v360 = vpack.c.bf16 %v306, %v304
        %v361 = vpack.c.bf16 %v307, %v305
        %v362 = vpack.c.bf16 %v310, %v308
        %v363 = vpack.c.bf16 %v311, %v309
        %v364 = vpack.c.bf16 %v314, %v312
        %v365 = vpack.c.bf16 %v315, %v313
        %v366 = vpack.c.bf16 %v318, %v316
        %v367 = vpack.c.bf16 %v319, %v317
        %v368 = vpack.c.bf16 %v322, %v320
        %v369 = vpack.c.bf16 %v323, %v321
        %v370 = vpack.c.bf16 %v326, %v324
        %v371 = vpack.c.bf16 %v327, %v325
        %v372 = vpack.c.bf16 %v330, %v328
        %v373 = vpack.c.bf16 %v331, %v329
        %v374 = vpack.c.bf16 %v334, %v332
        %v375 = vpack.c.bf16 %v335, %v333
        %v376 = vpack.c.bf16 %v338, %v336
        %v377 = vpack.c.bf16 %v339, %v337
        %v378 = vpack.c.bf16 %v342, %v340
        %v379 = vpack.c.bf16 %v343, %v341
        %v380 = vpack.c.bf16 %v346, %v344
        %v381 = vpack.c.bf16 %v347, %v345
        %v382 = vpack.c.bf16 %v350, %v348
        %v383 = vpack.c.bf16 %v351, %v349
        %v384 = vld [vmem:[#allocation5] sm:$0xff]
        %v385 = vld [vmem:[#allocation5 + $0x8] sm:$0xff]
        %v386 = vld [vmem:[#allocation5 + $0x10] sm:$0xff]
        %v387 = vld [vmem:[#allocation5 + $0x18] sm:$0xff]
        %v388 = vld [vmem:[#allocation5 + $0x20] sm:$0xff]
        %v389 = vld [vmem:[#allocation5 + $0x28] sm:$0xff]
        %v390 = vld [vmem:[#allocation5 + $0x30] sm:$0xff]
        %v391 = vld [vmem:[#allocation5 + $0x38] sm:$0xff]
        %v392 = vld [vmem:[#allocation5 + $0x40] sm:$0xff]
        %v393 = vld [vmem:[#allocation5 + $0x48] sm:$0xff]
        %v394 = vld [vmem:[#allocation5 + $0x50] sm:$0xff]
        %v395 = vld [vmem:[#allocation5 + $0x58] sm:$0xff]
        %v396 = vld [vmem:[#allocation5 + $0x60] sm:$0xff]
        %v397 = vld [vmem:[#allocation5 + $0x68] sm:$0xff]
        %v398 = vld [vmem:[#allocation5 + $0x70] sm:$0xff]
        %v399 = vld [vmem:[#allocation5 + $0x78] sm:$0xff]
        %v400 = vld [vmem:[#allocation5 + $0x80] sm:$0xff]
        %v401 = vld [vmem:[#allocation5 + $0x88] sm:$0xff]
        %v402 = vld [vmem:[#allocation5 + $0x90] sm:$0xff]
        %v403 = vld [vmem:[#allocation5 + $0x98] sm:$0xff]
        %v404 = vld [vmem:[#allocation5 + $0xa0] sm:$0xff]
        %v405 = vld [vmem:[#allocation5 + $0xa8] sm:$0xff]
        %v406 = vld [vmem:[#allocation5 + $0xb0] sm:$0xff]
        %v407 = vld [vmem:[#allocation5 + $0xb8] sm:$0xff]
        %v408 = vld [vmem:[#allocation5 + $0xc0] sm:$0xff]
        %v409 = vld [vmem:[#allocation5 + $0xc8] sm:$0xff]
        %v410 = vld [vmem:[#allocation5 + $0xd0] sm:$0xff]
        %v411 = vld [vmem:[#allocation5 + $0xd8] sm:$0xff]
        %v412 = vld [vmem:[#allocation5 + $0xe0] sm:$0xff]
        %v413 = vld [vmem:[#allocation5 + $0xe8] sm:$0xff]
        %v414 = vld [vmem:[#allocation5 + $0xf0] sm:$0xff]
        %v415 = vld [vmem:[#allocation5 + $0xf8] sm:$0xff]
        %v416 = vld [vmem:[#allocation5 + $0x100] sm:$0xff]
        %v417 = vld [vmem:[#allocation5 + $0x108] sm:$0xff]
        %v418 = vld [vmem:[#allocation5 + $0x110] sm:$0xff]
        %v419 = vld [vmem:[#allocation5 + $0x118] sm:$0xff]
        %v420 = vld [vmem:[#allocation5 + $0x120] sm:$0xff]
        %v421 = vld [vmem:[#allocation5 + $0x128] sm:$0xff]
        %v422 = vld [vmem:[#allocation5 + $0x130] sm:$0xff]
        %v423 = vld [vmem:[#allocation5 + $0x138] sm:$0xff]
        %v424 = vld [vmem:[#allocation5 + $0x140] sm:$0xff]
        %v425 = vld [vmem:[#allocation5 + $0x148] sm:$0xff]
        %v426 = vld [vmem:[#allocation5 + $0x150] sm:$0xff]
        %v427 = vld [vmem:[#allocation5 + $0x158] sm:$0xff]
        %v428 = vld [vmem:[#allocation5 + $0x160] sm:$0xff]
        %v429 = vld [vmem:[#allocation5 + $0x168] sm:$0xff]
        %v430 = vld [vmem:[#allocation5 + $0x170] sm:$0xff]
        %v431 = vld [vmem:[#allocation5 + $0x178] sm:$0xff]
        %v432 = vld [vmem:[#allocation5 + $0x180] sm:$0xff]
        %v433 = vld [vmem:[#allocation5 + $0x188] sm:$0xff]
        %v434 = vld [vmem:[#allocation5 + $0x190] sm:$0xff]
        %v435 = vld [vmem:[#allocation5 + $0x198] sm:$0xff]
        %v436 = vld [vmem:[#allocation5 + $0x1a0] sm:$0xff]
        %v437 = vld [vmem:[#allocation5 + $0x1a8] sm:$0xff]
        %v438 = vld [vmem:[#allocation5 + $0x1b0] sm:$0xff]
        %v439 = vld [vmem:[#allocation5 + $0x1b8] sm:$0xff]
        %v440 = vld [vmem:[#allocation5 + $0x1c0] sm:$0xff]
        %v441 = vld [vmem:[#allocation5 + $0x1c8] sm:$0xff]
        %v442 = vld [vmem:[#allocation5 + $0x1d0] sm:$0xff]
        %v443 = vld [vmem:[#allocation5 + $0x1d8] sm:$0xff]
        %v444 = vld [vmem:[#allocation5 + $0x1e0] sm:$0xff]
        %v445 = vld [vmem:[#allocation5 + $0x1e8] sm:$0xff]
        %v446 = vld [vmem:[#allocation5 + $0x1f0] sm:$0xff]
        %v447 = vld [vmem:[#allocation5 + $0x1f8] sm:$0xff]
        %v448 = vld [vmem:[#allocation7] sm:$0xf]
        %v450 = vlaneseq
        %v451 = vshrl.u32 %v450, 7
        %v452 = vsub.s32 0, %v451
        %v453 = vrot.slane %v448, %v452
        %v454 = vlaneseq
        %v455 = vshrl.u32 %v454, 7
        %v456 = vsub.s32 1, %v455
        %v457 = vrot.slane %v448, %v456
        %v458 = vlaneseq
        %v459 = vshrl.u32 %v458, 7
        %v460 = vsub.s32 2, %v459
        %v461 = vrot.slane %v448, %v460
        %v462 = vlaneseq
        %v463 = vshrl.u32 %v462, 7
        %v464 = vsub.s32 3, %v463
        %v465 = vrot.slane %v448, %v464
        %v534 = vunpack.c.l.b16 %v384
        %v535 = vunpack.c.h.b16 %v384
        %v536 = vunpack.c.l.b16 %v385
        %v537 = vunpack.c.h.b16 %v385
        %v538 = vunpack.c.l.b16 %v386
        %v539 = vunpack.c.h.b16 %v386
        %v540 = vunpack.c.l.b16 %v387
        %v541 = vunpack.c.h.b16 %v387
        %v542 = vunpack.c.l.b16 %v388
        %v543 = vunpack.c.h.b16 %v388
        %v544 = vunpack.c.l.b16 %v389
        %v545 = vunpack.c.h.b16 %v389
        %v546 = vunpack.c.l.b16 %v390
        %v547 = vunpack.c.h.b16 %v390
        %v548 = vunpack.c.l.b16 %v391
        %v549 = vunpack.c.h.b16 %v391
        %v550 = vunpack.c.l.b16 %v392
        %v551 = vunpack.c.h.b16 %v392
        %v552 = vunpack.c.l.b16 %v393
        %v553 = vunpack.c.h.b16 %v393
        %v554 = vunpack.c.l.b16 %v394
        %v555 = vunpack.c.h.b16 %v394
        %v556 = vunpack.c.l.b16 %v395
        %v557 = vunpack.c.h.b16 %v395
        %v558 = vunpack.c.l.b16 %v396
        %v559 = vunpack.c.h.b16 %v396
        %v560 = vunpack.c.l.b16 %v397
        %v561 = vunpack.c.h.b16 %v397
        %v562 = vunpack.c.l.b16 %v398
        %v563 = vunpack.c.h.b16 %v398
        %v564 = vunpack.c.l.b16 %v399
        %v565 = vunpack.c.h.b16 %v399
        %v566 = vunpack.c.l.b16 %v400
        %v567 = vunpack.c.h.b16 %v400
        %v568 = vunpack.c.l.b16 %v401
        %v569 = vunpack.c.h.b16 %v401
        %v570 = vunpack.c.l.b16 %v402
        %v571 = vunpack.c.h.b16 %v402
        %v572 = vunpack.c.l.b16 %v403
        %v573 = vunpack.c.h.b16 %v403
        %v574 = vunpack.c.l.b16 %v404
        %v575 = vunpack.c.h.b16 %v404
        %v576 = vunpack.c.l.b16 %v405
        %v577 = vunpack.c.h.b16 %v405
        %v578 = vunpack.c.l.b16 %v406
        %v579 = vunpack.c.h.b16 %v406
        %v580 = vunpack.c.l.b16 %v407
        %v581 = vunpack.c.h.b16 %v407
        %v582 = vunpack.c.l.b16 %v408
        %v583 = vunpack.c.h.b16 %v408
        %v584 = vunpack.c.l.b16 %v409
        %v585 = vunpack.c.h.b16 %v409
        %v586 = vunpack.c.l.b16 %v410
        %v587 = vunpack.c.h.b16 %v410
        %v588 = vunpack.c.l.b16 %v411
        %v589 = vunpack.c.h.b16 %v411
        %v590 = vunpack.c.l.b16 %v412
        %v591 = vunpack.c.h.b16 %v412
        %v592 = vunpack.c.l.b16 %v413
        %v593 = vunpack.c.h.b16 %v413
        %v594 = vunpack.c.l.b16 %v414
        %v595 = vunpack.c.h.b16 %v414
        %v596 = vunpack.c.l.b16 %v415
        %v597 = vunpack.c.h.b16 %v415
        %v598 = vunpack.c.l.b16 %v416
        %v599 = vunpack.c.h.b16 %v416
        %v600 = vunpack.c.l.b16 %v417
        %v601 = vunpack.c.h.b16 %v417
        %v602 = vunpack.c.l.b16 %v418
        %v603 = vunpack.c.h.b16 %v418
        %v604 = vunpack.c.l.b16 %v419
        %v605 = vunpack.c.h.b16 %v419
        %v606 = vunpack.c.l.b16 %v420
        %v607 = vunpack.c.h.b16 %v420
        %v608 = vunpack.c.l.b16 %v421
        %v609 = vunpack.c.h.b16 %v421
        %v610 = vunpack.c.l.b16 %v422
        %v611 = vunpack.c.h.b16 %v422
        %v612 = vunpack.c.l.b16 %v423
        %v613 = vunpack.c.h.b16 %v423
        %v614 = vunpack.c.l.b16 %v424
        %v615 = vunpack.c.h.b16 %v424
        %v616 = vunpack.c.l.b16 %v425
        %v617 = vunpack.c.h.b16 %v425
        %v618 = vunpack.c.l.b16 %v426
        %v619 = vunpack.c.h.b16 %v426
        %v620 = vunpack.c.l.b16 %v427
        %v621 = vunpack.c.h.b16 %v427
        %v622 = vunpack.c.l.b16 %v428
        %v623 = vunpack.c.h.b16 %v428
        %v624 = vunpack.c.l.b16 %v429
        %v625 = vunpack.c.h.b16 %v429
        %v626 = vunpack.c.l.b16 %v430
        %v627 = vunpack.c.h.b16 %v430
        %v628 = vunpack.c.l.b16 %v431
        %v629 = vunpack.c.h.b16 %v431
        %v630 = vunpack.c.l.b16 %v432
        %v631 = vunpack.c.h.b16 %v432
        %v632 = vunpack.c.l.b16 %v433
        %v633 = vunpack.c.h.b16 %v433
        %v634 = vunpack.c.l.b16 %v434
        %v635 = vunpack.c.h.b16 %v434
        %v636 = vunpack.c.l.b16 %v435
        %v637 = vunpack.c.h.b16 %v435
        %v638 = vunpack.c.l.b16 %v436
        %v639 = vunpack.c.h.b16 %v436
        %v640 = vunpack.c.l.b16 %v437
        %v641 = vunpack.c.h.b16 %v437
        %v642 = vunpack.c.l.b16 %v438
        %v643 = vunpack.c.h.b16 %v438
        %v644 = vunpack.c.l.b16 %v439
        %v645 = vunpack.c.h.b16 %v439
        %v646 = vunpack.c.l.b16 %v440
        %v647 = vunpack.c.h.b16 %v440
        %v648 = vunpack.c.l.b16 %v441
        %v649 = vunpack.c.h.b16 %v441
        %v650 = vunpack.c.l.b16 %v442
        %v651 = vunpack.c.h.b16 %v442
        %v652 = vunpack.c.l.b16 %v443
        %v653 = vunpack.c.h.b16 %v443
        %v654 = vunpack.c.l.b16 %v444
        %v655 = vunpack.c.h.b16 %v444
        %v656 = vunpack.c.l.b16 %v445
        %v657 = vunpack.c.h.b16 %v445
        %v658 = vunpack.c.l.b16 %v446
        %v659 = vunpack.c.h.b16 %v446
        %v660 = vunpack.c.l.b16 %v447
        %v661 = vunpack.c.h.b16 %v447
        %v662 = vpack.c.b16 %v538, %v534
        %v663 = vpack.c.b16 %v539, %v535
        %v664 = vpack.c.b16 %v540, %v536
        %v665 = vpack.c.b16 %v541, %v537
        %v666 = vpack.c.b16 %v546, %v542
        %v667 = vpack.c.b16 %v547, %v543
        %v668 = vpack.c.b16 %v548, %v544
        %v669 = vpack.c.b16 %v549, %v545
        %v670 = vpack.c.b16 %v554, %v550
        %v671 = vpack.c.b16 %v555, %v551
        %v672 = vpack.c.b16 %v556, %v552
        %v673 = vpack.c.b16 %v557, %v553
        %v674 = vpack.c.b16 %v562, %v558
        %v675 = vpack.c.b16 %v563, %v559
        %v676 = vpack.c.b16 %v564, %v560
        %v677 = vpack.c.b16 %v565, %v561
        %v678 = vpack.c.b16 %v570, %v566
        %v679 = vpack.c.b16 %v571, %v567
        %v680 = vpack.c.b16 %v572, %v568
        %v681 = vpack.c.b16 %v573, %v569
        %v682 = vpack.c.b16 %v578, %v574
        %v683 = vpack.c.b16 %v579, %v575
        %v684 = vpack.c.b16 %v580, %v576
        %v685 = vpack.c.b16 %v581, %v577
        %v686 = vpack.c.b16 %v586, %v582
        %v687 = vpack.c.b16 %v587, %v583
        %v688 = vpack.c.b16 %v588, %v584
        %v689 = vpack.c.b16 %v589, %v585
        %v690 = vpack.c.b16 %v594, %v590
        %v691 = vpack.c.b16 %v595, %v591
        %v692 = vpack.c.b16 %v596, %v592
        %v693 = vpack.c.b16 %v597, %v593
        %v694 = vpack.c.b16 %v602, %v598
        %v695 = vpack.c.b16 %v603, %v599
        %v696 = vpack.c.b16 %v604, %v600
        %v697 = vpack.c.b16 %v605, %v601
        %v698 = vpack.c.b16 %v610, %v606
        %v699 = vpack.c.b16 %v611, %v607
        %v700 = vpack.c.b16 %v612, %v608
        %v701 = vpack.c.b16 %v613, %v609
        %v702 = vpack.c.b16 %v618, %v614
        %v703 = vpack.c.b16 %v619, %v615
        %v704 = vpack.c.b16 %v620, %v616
        %v705 = vpack.c.b16 %v621, %v617
        %v706 = vpack.c.b16 %v626, %v622
        %v707 = vpack.c.b16 %v627, %v623
        %v708 = vpack.c.b16 %v628, %v624
        %v709 = vpack.c.b16 %v629, %v625
        %v710 = vpack.c.b16 %v634, %v630
        %v711 = vpack.c.b16 %v635, %v631
        %v712 = vpack.c.b16 %v636, %v632
        %v713 = vpack.c.b16 %v637, %v633
        %v714 = vpack.c.b16 %v642, %v638
        %v715 = vpack.c.b16 %v643, %v639
        %v716 = vpack.c.b16 %v644, %v640
        %v717 = vpack.c.b16 %v645, %v641
        %v718 = vpack.c.b16 %v650, %v646
        %v719 = vpack.c.b16 %v651, %v647
        %v720 = vpack.c.b16 %v652, %v648
        %v721 = vpack.c.b16 %v653, %v649
        %v722 = vpack.c.b16 %v658, %v654
        %v723 = vpack.c.b16 %v659, %v655
        %v724 = vpack.c.b16 %v660, %v656
        %v725 = vpack.c.b16 %v661, %v657
        %790 = vmatprep.subr.bf16.mxu0 %v691
        %791 = vmatpush1.bf16.msra.mxu0 %v690
        %792 = vmatprep.subr.bf16.mxu0 %v687
        %793 = vmatpush1.bf16.msra.mxu0 %v686
        %794 = vmatprep.subr.bf16.mxu0 %v683
        %795 = vmatpush1.bf16.msra.mxu0 %v682
        %796 = vmatprep.subr.bf16.mxu0 %v679
        %797 = vmatpush1.bf16.msra.mxu0 %v678
        %798 = vmatprep.subr.bf16.mxu0 %v675
        %799 = vmatpush1.bf16.msra.mxu0 %v674
        %800 = vmatprep.subr.bf16.mxu0 %v671
        %801 = vmatpush1.bf16.msra.mxu0 %v670
        %802 = vmatprep.subr.bf16.mxu0 %v667
        %803 = vmatpush1.bf16.msra.mxu0 %v666
        %804 = vmatprep.subr.bf16.mxu0 %v663
        %805 = vmatpush1.bf16.msra.mxu0 %v662
        %806 = vmatprep.subr.bf16.mxu0 %v723
        %807 = vmatpush2.bf16.msra.mxu0 %v722
        %808 = vmatprep.subr.bf16.mxu0 %v719
        %809 = vmatpush2.bf16.msra.mxu0 %v718
        %810 = vmatprep.subr.bf16.mxu0 %v715
        %811 = vmatpush2.bf16.msra.mxu0 %v714
        %812 = vmatprep.subr.bf16.mxu0 %v711
        %813 = vmatpush2.bf16.msra.mxu0 %v710
        %814 = vmatprep.subr.bf16.mxu0 %v707
        %815 = vmatpush2.bf16.msra.mxu0 %v706
        %816 = vmatprep.subr.bf16.mxu0 %v703
        %817 = vmatpush2.bf16.msra.mxu0 %v702
        %818 = vmatprep.subr.bf16.mxu0 %v699
        %819 = vmatpush2.bf16.msra.mxu0 %v698
        %820 = vmatprep.subr.bf16.mxu0 %v695
        %821 = vmatpush2.bf16.msra.mxu0 %v694
        %822 = vmatprep.mubr.bf16.mxu0 %v353
        %823 = vmatmul.mubr.bf16.gmra.mxu0 %v352
        %v824 = vpop.f32.mrf.mxu0
        %v825 = vadd.f32 %v453, %v824
        %v826 = vpop.f32.mrf.mxu0
        %v827 = vadd.f32 %v457, %v826
        %v828 = vpop.f32.mrf.mxu0
        %v829 = vadd.f32 %v453, %v828
        %v830 = vpop.f32.mrf.mxu0
        %v831 = vadd.f32 %v457, %v830
        %832 = vmatprep.mubr.bf16.mxu0 %v355
        %833 = vmatmul.mubr.bf16.gmra.mxu0 %v354
        %v834 = vpop.f32.mrf.mxu0
        %v835 = vadd.f32 %v453, %v834
        %v836 = vpop.f32.mrf.mxu0
        %v837 = vadd.f32 %v457, %v836
        %v838 = vpop.f32.mrf.mxu0
        %v839 = vadd.f32 %v453, %v838
        %v840 = vpop.f32.mrf.mxu0
        %v841 = vadd.f32 %v457, %v840
        %842 = vmatprep.mubr.bf16.mxu0 %v357
        %843 = vmatmul.mubr.bf16.gmra.mxu0 %v356
        %v844 = vpop.f32.mrf.mxu0
        %v845 = vadd.f32 %v453, %v844
        %v846 = vpop.f32.mrf.mxu0
        %v847 = vadd.f32 %v457, %v846
        %v848 = vpop.f32.mrf.mxu0
        %v849 = vadd.f32 %v453, %v848
        %v850 = vpop.f32.mrf.mxu0
        %v851 = vadd.f32 %v457, %v850
        %852 = vmatprep.mubr.bf16.mxu0 %v359
        %853 = vmatmul.mubr.bf16.gmra.mxu0 %v358
        %v854 = vpop.f32.mrf.mxu0
        %v855 = vadd.f32 %v453, %v854
        %v856 = vpop.f32.mrf.mxu0
        %v857 = vadd.f32 %v457, %v856
        %v858 = vpop.f32.mrf.mxu0
        %v859 = vadd.f32 %v453, %v858
        %v860 = vpop.f32.mrf.mxu0
        %v861 = vadd.f32 %v457, %v860
        %862 = vmatprep.mubr.bf16.mxu0 %v361
        %863 = vmatmul.mubr.bf16.gmra.mxu0 %v360
        %v864 = vpop.f32.mrf.mxu0
        %v865 = vadd.f32 %v453, %v864
        %v866 = vpop.f32.mrf.mxu0
        %v867 = vadd.f32 %v457, %v866
        %v868 = vpop.f32.mrf.mxu0
        %v869 = vadd.f32 %v453, %v868
        %v870 = vpop.f32.mrf.mxu0
        %v871 = vadd.f32 %v457, %v870
        %872 = vmatprep.mubr.bf16.mxu0 %v363
        %873 = vmatmul.mubr.bf16.gmra.mxu0 %v362
        %v874 = vpop.f32.mrf.mxu0
        %v875 = vadd.f32 %v453, %v874
        %v876 = vpop.f32.mrf.mxu0
        %v877 = vadd.f32 %v457, %v876
        %v878 = vpop.f32.mrf.mxu0
        %v879 = vadd.f32 %v453, %v878
        %v880 = vpop.f32.mrf.mxu0
        %v881 = vadd.f32 %v457, %v880
        %882 = vmatprep.mubr.bf16.mxu0 %v365
        %883 = vmatmul.mubr.bf16.gmra.mxu0 %v364
        %v884 = vpop.f32.mrf.mxu0
        %v885 = vadd.f32 %v453, %v884
        %v886 = vpop.f32.mrf.mxu0
        %v887 = vadd.f32 %v457, %v886
        %v888 = vpop.f32.mrf.mxu0
        %v889 = vadd.f32 %v453, %v888
        %v890 = vpop.f32.mrf.mxu0
        %v891 = vadd.f32 %v457, %v890
        %892 = vmatprep.mubr.bf16.mxu0 %v367
        %893 = vmatmul.mubr.bf16.gmra.mxu0 %v366
        %v894 = vpop.f32.mrf.mxu0
        %v895 = vadd.f32 %v453, %v894
        %v896 = vpop.f32.mrf.mxu0
        %v897 = vadd.f32 %v457, %v896
        %v898 = vpop.f32.mrf.mxu0
        %v899 = vadd.f32 %v453, %v898
        %v900 = vpop.f32.mrf.mxu0
        %v901 = vadd.f32 %v457, %v900
        %902 = vmatprep.mubr.bf16.mxu0 %v369
        %903 = vmatmul.mubr.bf16.gmra.mxu0 %v368
        %v904 = vpop.f32.mrf.mxu0
        %v905 = vadd.f32 %v453, %v904
        %v906 = vpop.f32.mrf.mxu0
        %v907 = vadd.f32 %v457, %v906
        %v908 = vpop.f32.mrf.mxu0
        %v909 = vadd.f32 %v453, %v908
        %v910 = vpop.f32.mrf.mxu0
        %v911 = vadd.f32 %v457, %v910
        %912 = vmatprep.mubr.bf16.mxu0 %v371
        %913 = vmatmul.mubr.bf16.gmra.mxu0 %v370
        %v914 = vpop.f32.mrf.mxu0
        %v915 = vadd.f32 %v453, %v914
        %v916 = vpop.f32.mrf.mxu0
        %v917 = vadd.f32 %v457, %v916
        %v918 = vpop.f32.mrf.mxu0
        %v919 = vadd.f32 %v453, %v918
        %v920 = vpop.f32.mrf.mxu0
        %v921 = vadd.f32 %v457, %v920
        %922 = vmatprep.mubr.bf16.mxu0 %v373
        %923 = vmatmul.mubr.bf16.gmra.mxu0 %v372
        %v924 = vpop.f32.mrf.mxu0
        %v925 = vadd.f32 %v453, %v924
        %v926 = vpop.f32.mrf.mxu0
        %v927 = vadd.f32 %v457, %v926
        %v928 = vpop.f32.mrf.mxu0
        %v929 = vadd.f32 %v453, %v928
        %v930 = vpop.f32.mrf.mxu0
        %v931 = vadd.f32 %v457, %v930
        %932 = vmatprep.mubr.bf16.mxu0 %v375
        %933 = vmatmul.mubr.bf16.gmra.mxu0 %v374
        %v934 = vpop.f32.mrf.mxu0
        %v935 = vadd.f32 %v453, %v934
        %v936 = vpop.f32.mrf.mxu0
        %v937 = vadd.f32 %v457, %v936
        %v938 = vpop.f32.mrf.mxu0
        %v939 = vadd.f32 %v453, %v938
        %v940 = vpop.f32.mrf.mxu0
        %v941 = vadd.f32 %v457, %v940
        %942 = vmatprep.mubr.bf16.mxu0 %v377
        %943 = vmatmul.mubr.bf16.gmra.mxu0 %v376
        %v944 = vpop.f32.mrf.mxu0
        %v945 = vadd.f32 %v453, %v944
        %v946 = vpop.f32.mrf.mxu0
        %v947 = vadd.f32 %v457, %v946
        %v948 = vpop.f32.mrf.mxu0
        %v949 = vadd.f32 %v453, %v948
        %v950 = vpop.f32.mrf.mxu0
        %v951 = vadd.f32 %v457, %v950
        %952 = vmatprep.mubr.bf16.mxu0 %v379
        %953 = vmatmul.mubr.bf16.gmra.mxu0 %v378
        %v954 = vpop.f32.mrf.mxu0
        %v955 = vadd.f32 %v453, %v954
        %v956 = vpop.f32.mrf.mxu0
        %v957 = vadd.f32 %v457, %v956
        %v958 = vpop.f32.mrf.mxu0
        %v959 = vadd.f32 %v453, %v958
        %v960 = vpop.f32.mrf.mxu0
        %v961 = vadd.f32 %v457, %v960
        %962 = vmatprep.mubr.bf16.mxu0 %v381
        %963 = vmatmul.mubr.bf16.gmra.mxu0 %v380
        %v964 = vpop.f32.mrf.mxu0
        %v965 = vadd.f32 %v453, %v964
        %v966 = vpop.f32.mrf.mxu0
        %v967 = vadd.f32 %v457, %v966
        %v968 = vpop.f32.mrf.mxu0
        %v969 = vadd.f32 %v453, %v968
        %v970 = vpop.f32.mrf.mxu0
        %v971 = vadd.f32 %v457, %v970
        %972 = vmatprep.mubr.bf16.mxu0 %v383
        %973 = vmatmul.mubr.bf16.gmra.mxu0 %v382
        %v974 = vpop.f32.mrf.mxu0
        %v975 = vadd.f32 %v453, %v974
        %v976 = vpop.f32.mrf.mxu0
        %v977 = vadd.f32 %v457, %v976
        %v978 = vpop.f32.mrf.mxu0
        %v979 = vadd.f32 %v453, %v978
        %v980 = vpop.f32.mrf.mxu0
        %v981 = vadd.f32 %v457, %v980
        %982 = vdwg.mxu0
        %983 = vmatprep.subr.bf16.mxu0 %v693
        %984 = vmatpush1.bf16.msra.mxu0 %v692
        %985 = vmatprep.subr.bf16.mxu0 %v689
        %986 = vmatpush1.bf16.msra.mxu0 %v688
        %987 = vmatprep.subr.bf16.mxu0 %v685
        %988 = vmatpush1.bf16.msra.mxu0 %v684
        %989 = vmatprep.subr.bf16.mxu0 %v681
        %990 = vmatpush1.bf16.msra.mxu0 %v680
        %991 = vmatprep.subr.bf16.mxu0 %v677
        %992 = vmatpush1.bf16.msra.mxu0 %v676
        %993 = vmatprep.subr.bf16.mxu0 %v673
        %994 = vmatpush1.bf16.msra.mxu0 %v672
        %995 = vmatprep.subr.bf16.mxu0 %v669
        %996 = vmatpush1.bf16.msra.mxu0 %v668
        %997 = vmatprep.subr.bf16.mxu0 %v665
        %998 = vmatpush1.bf16.msra.mxu0 %v664
        %999 = vmatprep.subr.bf16.mxu0 %v725
        %1000 = vmatpush2.bf16.msra.mxu0 %v724
        %1001 = vmatprep.subr.bf16.mxu0 %v721
        %1002 = vmatpush2.bf16.msra.mxu0 %v720
        %1003 = vmatprep.subr.bf16.mxu0 %v717
        %1004 = vmatpush2.bf16.msra.mxu0 %v716
        %1005 = vmatprep.subr.bf16.mxu0 %v713
        %1006 = vmatpush2.bf16.msra.mxu0 %v712
        %1007 = vmatprep.subr.bf16.mxu0 %v709
        %1008 = vmatpush2.bf16.msra.mxu0 %v708
        %1009 = vmatprep.subr.bf16.mxu0 %v705
        %1010 = vmatpush2.bf16.msra.mxu0 %v704
        %1011 = vmatprep.subr.bf16.mxu0 %v701
        %1012 = vmatpush2.bf16.msra.mxu0 %v700
        %1013 = vmatprep.subr.bf16.mxu0 %v697
        %1014 = vmatpush2.bf16.msra.mxu0 %v696
        %1015 = vmatprep.mubr.bf16.mxu0 %v353
        %1016 = vmatmul.mubr.bf16.gmra.mxu0 %v352
        %v1017 = vpop.f32.mrf.mxu0
        %v1018 = vadd.f32 %v461, %v1017
        %v1019 = vpop.f32.mrf.mxu0
        %v1020 = vadd.f32 %v465, %v1019
        %v1021 = vpop.f32.mrf.mxu0
        %v1022 = vadd.f32 %v461, %v1021
        %v1023 = vpop.f32.mrf.mxu0
        %v1024 = vadd.f32 %v465, %v1023
        %1025 = vmatprep.mubr.bf16.mxu0 %v355
        %1026 = vmatmul.mubr.bf16.gmra.mxu0 %v354
        %v1027 = vpop.f32.mrf.mxu0
        %v1028 = vadd.f32 %v461, %v1027
        %v1029 = vpop.f32.mrf.mxu0
        %v1030 = vadd.f32 %v465, %v1029
        %v1031 = vpop.f32.mrf.mxu0
        %v1032 = vadd.f32 %v461, %v1031
        %v1033 = vpop.f32.mrf.mxu0
        %v1034 = vadd.f32 %v465, %v1033
        %1035 = vmatprep.mubr.bf16.mxu0 %v357
        %1036 = vmatmul.mubr.bf16.gmra.mxu0 %v356
        %v1037 = vpop.f32.mrf.mxu0
        %v1038 = vadd.f32 %v461, %v1037
        %v1039 = vpop.f32.mrf.mxu0
        %v1040 = vadd.f32 %v465, %v1039
        %v1041 = vpop.f32.mrf.mxu0
        %v1042 = vadd.f32 %v461, %v1041
        %v1043 = vpop.f32.mrf.mxu0
        %v1044 = vadd.f32 %v465, %v1043
        %1045 = vmatprep.mubr.bf16.mxu0 %v359
        %1046 = vmatmul.mubr.bf16.gmra.mxu0 %v358
        %v1047 = vpop.f32.mrf.mxu0
        %v1048 = vadd.f32 %v461, %v1047
        %v1049 = vpop.f32.mrf.mxu0
        %v1050 = vadd.f32 %v465, %v1049
        %v1051 = vpop.f32.mrf.mxu0
        %v1052 = vadd.f32 %v461, %v1051
        %v1053 = vpop.f32.mrf.mxu0
        %v1054 = vadd.f32 %v465, %v1053
        %1055 = vmatprep.mubr.bf16.mxu0 %v361
        %1056 = vmatmul.mubr.bf16.gmra.mxu0 %v360
        %v1057 = vpop.f32.mrf.mxu0
        %v1058 = vadd.f32 %v461, %v1057
        %v1059 = vpop.f32.mrf.mxu0
        %v1060 = vadd.f32 %v465, %v1059
        %v1061 = vpop.f32.mrf.mxu0
        %v1062 = vadd.f32 %v461, %v1061
        %v1063 = vpop.f32.mrf.mxu0
        %v1064 = vadd.f32 %v465, %v1063
        %1065 = vmatprep.mubr.bf16.mxu0 %v363
        %1066 = vmatmul.mubr.bf16.gmra.mxu0 %v362
        %v1067 = vpop.f32.mrf.mxu0
        %v1068 = vadd.f32 %v461, %v1067
        %v1069 = vpop.f32.mrf.mxu0
        %v1070 = vadd.f32 %v465, %v1069
        %v1071 = vpop.f32.mrf.mxu0
        %v1072 = vadd.f32 %v461, %v1071
        %v1073 = vpop.f32.mrf.mxu0
        %v1074 = vadd.f32 %v465, %v1073
        %1075 = vmatprep.mubr.bf16.mxu0 %v365
        %1076 = vmatmul.mubr.bf16.gmra.mxu0 %v364
        %v1077 = vpop.f32.mrf.mxu0
        %v1078 = vadd.f32 %v461, %v1077
        %v1079 = vpop.f32.mrf.mxu0
        %v1080 = vadd.f32 %v465, %v1079
        %v1081 = vpop.f32.mrf.mxu0
        %v1082 = vadd.f32 %v461, %v1081
        %v1083 = vpop.f32.mrf.mxu0
        %v1084 = vadd.f32 %v465, %v1083
        %1085 = vmatprep.mubr.bf16.mxu0 %v367
        %1086 = vmatmul.mubr.bf16.gmra.mxu0 %v366
        %v1087 = vpop.f32.mrf.mxu0
        %v1088 = vadd.f32 %v461, %v1087
        %v1089 = vpop.f32.mrf.mxu0
        %v1090 = vadd.f32 %v465, %v1089
        %v1091 = vpop.f32.mrf.mxu0
        %v1092 = vadd.f32 %v461, %v1091
        %v1093 = vpop.f32.mrf.mxu0
        %v1094 = vadd.f32 %v465, %v1093
        %1095 = vmatprep.mubr.bf16.mxu0 %v369
        %1096 = vmatmul.mubr.bf16.gmra.mxu0 %v368
        %v1097 = vpop.f32.mrf.mxu0
        %v1098 = vadd.f32 %v461, %v1097
        %v1099 = vpop.f32.mrf.mxu0
        %v1100 = vadd.f32 %v465, %v1099
        %v1101 = vpop.f32.mrf.mxu0
        %v1102 = vadd.f32 %v461, %v1101
        %v1103 = vpop.f32.mrf.mxu0
        %v1104 = vadd.f32 %v465, %v1103
        %1105 = vmatprep.mubr.bf16.mxu0 %v371
        %1106 = vmatmul.mubr.bf16.gmra.mxu0 %v370
        %v1107 = vpop.f32.mrf.mxu0
        %v1108 = vadd.f32 %v461, %v1107
        %v1109 = vpop.f32.mrf.mxu0
        %v1110 = vadd.f32 %v465, %v1109
        %v1111 = vpop.f32.mrf.mxu0
        %v1112 = vadd.f32 %v461, %v1111
        %v1113 = vpop.f32.mrf.mxu0
        %v1114 = vadd.f32 %v465, %v1113
        %1115 = vmatprep.mubr.bf16.mxu0 %v373
        %1116 = vmatmul.mubr.bf16.gmra.mxu0 %v372
        %v1117 = vpop.f32.mrf.mxu0
        %v1118 = vadd.f32 %v461, %v1117
        %v1119 = vpop.f32.mrf.mxu0
        %v1120 = vadd.f32 %v465, %v1119
        %v1121 = vpop.f32.mrf.mxu0
        %v1122 = vadd.f32 %v461, %v1121
        %v1123 = vpop.f32.mrf.mxu0
        %v1124 = vadd.f32 %v465, %v1123
        %1125 = vmatprep.mubr.bf16.mxu0 %v375
        %1126 = vmatmul.mubr.bf16.gmra.mxu0 %v374
        %v1127 = vpop.f32.mrf.mxu0
        %v1128 = vadd.f32 %v461, %v1127
        %v1129 = vpop.f32.mrf.mxu0
        %v1130 = vadd.f32 %v465, %v1129
        %v1131 = vpop.f32.mrf.mxu0
        %v1132 = vadd.f32 %v461, %v1131
        %v1133 = vpop.f32.mrf.mxu0
        %v1134 = vadd.f32 %v465, %v1133
        %1135 = vmatprep.mubr.bf16.mxu0 %v377
        %1136 = vmatmul.mubr.bf16.gmra.mxu0 %v376
        %v1137 = vpop.f32.mrf.mxu0
        %v1138 = vadd.f32 %v461, %v1137
        %v1139 = vpop.f32.mrf.mxu0
        %v1140 = vadd.f32 %v465, %v1139
        %v1141 = vpop.f32.mrf.mxu0
        %v1142 = vadd.f32 %v461, %v1141
        %v1143 = vpop.f32.mrf.mxu0
        %v1144 = vadd.f32 %v465, %v1143
        %1145 = vmatprep.mubr.bf16.mxu0 %v379
        %1146 = vmatmul.mubr.bf16.gmra.mxu0 %v378
        %v1147 = vpop.f32.mrf.mxu0
        %v1148 = vadd.f32 %v461, %v1147
        %v1149 = vpop.f32.mrf.mxu0
        %v1150 = vadd.f32 %v465, %v1149
        %v1151 = vpop.f32.mrf.mxu0
        %v1152 = vadd.f32 %v461, %v1151
        %v1153 = vpop.f32.mrf.mxu0
        %v1154 = vadd.f32 %v465, %v1153
        %1155 = vmatprep.mubr.bf16.mxu0 %v381
        %1156 = vmatmul.mubr.bf16.gmra.mxu0 %v380
        %v1157 = vpop.f32.mrf.mxu0
        %v1158 = vadd.f32 %v461, %v1157
        %v1159 = vpop.f32.mrf.mxu0
        %v1160 = vadd.f32 %v465, %v1159
        %v1161 = vpop.f32.mrf.mxu0
        %v1162 = vadd.f32 %v461, %v1161
        %v1163 = vpop.f32.mrf.mxu0
        %v1164 = vadd.f32 %v465, %v1163
        %1165 = vmatprep.mubr.bf16.mxu0 %v383
        %1166 = vmatmul.mubr.bf16.gmra.mxu0 %v382
        %v1167 = vpop.f32.mrf.mxu0
        %v1168 = vadd.f32 %v461, %v1167
        %v1169 = vpop.f32.mrf.mxu0
        %v1170 = vadd.f32 %v465, %v1169
        %v1171 = vpop.f32.mrf.mxu0
        %v1172 = vadd.f32 %v461, %v1171
        %v1173 = vpop.f32.mrf.mxu0
        %v1174 = vadd.f32 %v465, %v1173
        %1175 = vdwg.mxu0
        %v1176 = vmul.f32 %v825, %v825
        %v1177 = vmul.f32 %v827, %v827
        %v1178 = vmul.f32 %v1018, %v1018
        %v1179 = vmul.f32 %v1020, %v1020
        %v1180 = vmul.f32 %v829, %v829
        %v1181 = vmul.f32 %v831, %v831
        %v1182 = vmul.f32 %v1022, %v1022
        %v1183 = vmul.f32 %v1024, %v1024
        %v1184 = vmul.f32 %v835, %v835
        %v1185 = vmul.f32 %v837, %v837
        %v1186 = vmul.f32 %v1028, %v1028
        %v1187 = vmul.f32 %v1030, %v1030
        %v1188 = vmul.f32 %v839, %v839
        %v1189 = vmul.f32 %v841, %v841
        %v1190 = vmul.f32 %v1032, %v1032
        %v1191 = vmul.f32 %v1034, %v1034
        %v1192 = vmul.f32 %v845, %v845
        %v1193 = vmul.f32 %v847, %v847
        %v1194 = vmul.f32 %v1038, %v1038
        %v1195 = vmul.f32 %v1040, %v1040
        %v1196 = vmul.f32 %v849, %v849
        %v1197 = vmul.f32 %v851, %v851
        %v1198 = vmul.f32 %v1042, %v1042
        %v1199 = vmul.f32 %v1044, %v1044
        %v1200 = vmul.f32 %v855, %v855
        %v1201 = vmul.f32 %v857, %v857
        %v1202 = vmul.f32 %v1048, %v1048
        %v1203 = vmul.f32 %v1050, %v1050
        %v1204 = vmul.f32 %v859, %v859
        %v1205 = vmul.f32 %v861, %v861
        %v1206 = vmul.f32 %v1052, %v1052
        %v1207 = vmul.f32 %v1054, %v1054
        %v1208 = vmul.f32 %v865, %v865
        %v1209 = vmul.f32 %v867, %v867
        %v1210 = vmul.f32 %v1058, %v1058
        %v1211 = vmul.f32 %v1060, %v1060
        %v1212 = vmul.f32 %v869, %v869
        %v1213 = vmul.f32 %v871, %v871
        %v1214 = vmul.f32 %v1062, %v1062
        %v1215 = vmul.f32 %v1064, %v1064
        %v1216 = vmul.f32 %v875, %v875
        %v1217 = vmul.f32 %v877, %v877
        %v1218 = vmul.f32 %v1068, %v1068
        %v1219 = vmul.f32 %v1070, %v1070
        %v1220 = vmul.f32 %v879, %v879
        %v1221 = vmul.f32 %v881, %v881
        %v1222 = vmul.f32 %v1072, %v1072
        %v1223 = vmul.f32 %v1074, %v1074
        %v1224 = vmul.f32 %v885, %v885
        %v1225 = vmul.f32 %v887, %v887
        %v1226 = vmul.f32 %v1078, %v1078
        %v1227 = vmul.f32 %v1080, %v1080
        %v1228 = vmul.f32 %v889, %v889
        %v1229 = vmul.f32 %v891, %v891
        %v1230 = vmul.f32 %v1082, %v1082
        %v1231 = vmul.f32 %v1084, %v1084
        %v1232 = vmul.f32 %v895, %v895
        %v1233 = vmul.f32 %v897, %v897
        %v1234 = vmul.f32 %v1088, %v1088
        %v1235 = vmul.f32 %v1090, %v1090
        %v1236 = vmul.f32 %v899, %v899
        %v1237 = vmul.f32 %v901, %v901
        %v1238 = vmul.f32 %v1092, %v1092
        %v1239 = vmul.f32 %v1094, %v1094
        %v1240 = vmul.f32 %v905, %v905
        %v1241 = vmul.f32 %v907, %v907
        %v1242 = vmul.f32 %v1098, %v1098
        %v1243 = vmul.f32 %v1100, %v1100
        %v1244 = vmul.f32 %v909, %v909
        %v1245 = vmul.f32 %v911, %v911
        %v1246 = vmul.f32 %v1102, %v1102
        %v1247 = vmul.f32 %v1104, %v1104
        %v1248 = vmul.f32 %v915, %v915
        %v1249 = vmul.f32 %v917, %v917
        %v1250 = vmul.f32 %v1108, %v1108
        %v1251 = vmul.f32 %v1110, %v1110
        %v1252 = vmul.f32 %v919, %v919
        %v1253 = vmul.f32 %v921, %v921
        %v1254 = vmul.f32 %v1112, %v1112
        %v1255 = vmul.f32 %v1114, %v1114
        %v1256 = vmul.f32 %v925, %v925
        %v1257 = vmul.f32 %v927, %v927
        %v1258 = vmul.f32 %v1118, %v1118
        %v1259 = vmul.f32 %v1120, %v1120
        %v1260 = vmul.f32 %v929, %v929
        %v1261 = vmul.f32 %v931, %v931
        %v1262 = vmul.f32 %v1122, %v1122
        %v1263 = vmul.f32 %v1124, %v1124
        %v1264 = vmul.f32 %v935, %v935
        %v1265 = vmul.f32 %v937, %v937
        %v1266 = vmul.f32 %v1128, %v1128
        %v1267 = vmul.f32 %v1130, %v1130
        %v1268 = vmul.f32 %v939, %v939
        %v1269 = vmul.f32 %v941, %v941
        %v1270 = vmul.f32 %v1132, %v1132
        %v1271 = vmul.f32 %v1134, %v1134
        %v1272 = vmul.f32 %v945, %v945
        %v1273 = vmul.f32 %v947, %v947
        %v1274 = vmul.f32 %v1138, %v1138
        %v1275 = vmul.f32 %v1140, %v1140
        %v1276 = vmul.f32 %v949, %v949
        %v1277 = vmul.f32 %v951, %v951
        %v1278 = vmul.f32 %v1142, %v1142
        %v1279 = vmul.f32 %v1144, %v1144
        %v1280 = vmul.f32 %v955, %v955
        %v1281 = vmul.f32 %v957, %v957
        %v1282 = vmul.f32 %v1148, %v1148
        %v1283 = vmul.f32 %v1150, %v1150
        %v1284 = vmul.f32 %v959, %v959
        %v1285 = vmul.f32 %v961, %v961
        %v1286 = vmul.f32 %v1152, %v1152
        %v1287 = vmul.f32 %v1154, %v1154
        %v1288 = vmul.f32 %v965, %v965
        %v1289 = vmul.f32 %v967, %v967
        %v1290 = vmul.f32 %v1158, %v1158
        %v1291 = vmul.f32 %v1160, %v1160
        %v1292 = vmul.f32 %v969, %v969
        %v1293 = vmul.f32 %v971, %v971
        %v1294 = vmul.f32 %v1162, %v1162
        %v1295 = vmul.f32 %v1164, %v1164
        %v1296 = vmul.f32 %v975, %v975
        %v1297 = vmul.f32 %v977, %v977
        %v1298 = vmul.f32 %v1168, %v1168
        %v1299 = vmul.f32 %v1170, %v1170
        %v1300 = vmul.f32 %v979, %v979
        %v1301 = vmul.f32 %v981, %v981
        %v1302 = vmul.f32 %v1172, %v1172
        %v1303 = vmul.f32 %v1174, %v1174
        %v1304 = vmul.f32 %v825, %v1176
        %v1305 = vmul.f32 %v827, %v1177
        %v1306 = vmul.f32 %v1018, %v1178
        %v1307 = vmul.f32 %v1020, %v1179
        %v1308 = vmul.f32 %v829, %v1180
        %v1309 = vmul.f32 %v831, %v1181
        %v1310 = vmul.f32 %v1022, %v1182
        %v1311 = vmul.f32 %v1024, %v1183
        %v1312 = vmul.f32 %v835, %v1184
        %v1313 = vmul.f32 %v837, %v1185
        %v1314 = vmul.f32 %v1028, %v1186
        %v1315 = vmul.f32 %v1030, %v1187
        %v1316 = vmul.f32 %v839, %v1188
        %v1317 = vmul.f32 %v841, %v1189
        %v1318 = vmul.f32 %v1032, %v1190
        %v1319 = vmul.f32 %v1034, %v1191
        %v1320 = vmul.f32 %v845, %v1192
        %v1321 = vmul.f32 %v847, %v1193
        %v1322 = vmul.f32 %v1038, %v1194
        %v1323 = vmul.f32 %v1040, %v1195
        %v1324 = vmul.f32 %v849, %v1196
        %v1325 = vmul.f32 %v851, %v1197
        %v1326 = vmul.f32 %v1042, %v1198
        %v1327 = vmul.f32 %v1044, %v1199
        %v1328 = vmul.f32 %v855, %v1200
        %v1329 = vmul.f32 %v857, %v1201
        %v1330 = vmul.f32 %v1048, %v1202
        %v1331 = vmul.f32 %v1050, %v1203
        %v1332 = vmul.f32 %v859, %v1204
        %v1333 = vmul.f32 %v861, %v1205
        %v1334 = vmul.f32 %v1052, %v1206
        %v1335 = vmul.f32 %v1054, %v1207
        %v1336 = vmul.f32 %v865, %v1208
        %v1337 = vmul.f32 %v867, %v1209
        %v1338 = vmul.f32 %v1058, %v1210
        %v1339 = vmul.f32 %v1060, %v1211
        %v1340 = vmul.f32 %v869, %v1212
        %v1341 = vmul.f32 %v871, %v1213
        %v1342 = vmul.f32 %v1062, %v1214
        %v1343 = vmul.f32 %v1064, %v1215
        %v1344 = vmul.f32 %v875, %v1216
        %v1345 = vmul.f32 %v877, %v1217
        %v1346 = vmul.f32 %v1068, %v1218
        %v1347 = vmul.f32 %v1070, %v1219
        %v1348 = vmul.f32 %v879, %v1220
        %v1349 = vmul.f32 %v881, %v1221
        %v1350 = vmul.f32 %v1072, %v1222
        %v1351 = vmul.f32 %v1074, %v1223
        %v1352 = vmul.f32 %v885, %v1224
        %v1353 = vmul.f32 %v887, %v1225
        %v1354 = vmul.f32 %v1078, %v1226
        %v1355 = vmul.f32 %v1080, %v1227
        %v1356 = vmul.f32 %v889, %v1228
        %v1357 = vmul.f32 %v891, %v1229
        %v1358 = vmul.f32 %v1082, %v1230
        %v1359 = vmul.f32 %v1084, %v1231
        %v1360 = vmul.f32 %v895, %v1232
        %v1361 = vmul.f32 %v897, %v1233
        %v1362 = vmul.f32 %v1088, %v1234
        %v1363 = vmul.f32 %v1090, %v1235
        %v1364 = vmul.f32 %v899, %v1236
        %v1365 = vmul.f32 %v901, %v1237
        %v1366 = vmul.f32 %v1092, %v1238
        %v1367 = vmul.f32 %v1094, %v1239
        %v1368 = vmul.f32 %v905, %v1240
        %v1369 = vmul.f32 %v907, %v1241
        %v1370 = vmul.f32 %v1098, %v1242
        %v1371 = vmul.f32 %v1100, %v1243
        %v1372 = vmul.f32 %v909, %v1244
        %v1373 = vmul.f32 %v911, %v1245
        %v1374 = vmul.f32 %v1102, %v1246
        %v1375 = vmul.f32 %v1104, %v1247
        %v1376 = vmul.f32 %v915, %v1248
        %v1377 = vmul.f32 %v917, %v1249
        %v1378 = vmul.f32 %v1108, %v1250
        %v1379 = vmul.f32 %v1110, %v1251
        %v1380 = vmul.f32 %v919, %v1252
        %v1381 = vmul.f32 %v921, %v1253
        %v1382 = vmul.f32 %v1112, %v1254
        %v1383 = vmul.f32 %v1114, %v1255
        %v1384 = vmul.f32 %v925, %v1256
        %v1385 = vmul.f32 %v927, %v1257
        %v1386 = vmul.f32 %v1118, %v1258
        %v1387 = vmul.f32 %v1120, %v1259
        %v1388 = vmul.f32 %v929, %v1260
        %v1389 = vmul.f32 %v931, %v1261
        %v1390 = vmul.f32 %v1122, %v1262
        %v1391 = vmul.f32 %v1124, %v1263
        %v1392 = vmul.f32 %v935, %v1264
        %v1393 = vmul.f32 %v937, %v1265
        %v1394 = vmul.f32 %v1128, %v1266
        %v1395 = vmul.f32 %v1130, %v1267
        %v1396 = vmul.f32 %v939, %v1268
        %v1397 = vmul.f32 %v941, %v1269
        %v1398 = vmul.f32 %v1132, %v1270
        %v1399 = vmul.f32 %v1134, %v1271
        %v1400 = vmul.f32 %v945, %v1272
        %v1401 = vmul.f32 %v947, %v1273
        %v1402 = vmul.f32 %v1138, %v1274
        %v1403 = vmul.f32 %v1140, %v1275
        %v1404 = vmul.f32 %v949, %v1276
        %v1405 = vmul.f32 %v951, %v1277
        %v1406 = vmul.f32 %v1142, %v1278
        %v1407 = vmul.f32 %v1144, %v1279
        %v1408 = vmul.f32 %v955, %v1280
        %v1409 = vmul.f32 %v957, %v1281
        %v1410 = vmul.f32 %v1148, %v1282
        %v1411 = vmul.f32 %v1150, %v1283
        %v1412 = vmul.f32 %v959, %v1284
        %v1413 = vmul.f32 %v961, %v1285
        %v1414 = vmul.f32 %v1152, %v1286
        %v1415 = vmul.f32 %v1154, %v1287
        %v1416 = vmul.f32 %v965, %v1288
        %v1417 = vmul.f32 %v967, %v1289
        %v1418 = vmul.f32 %v1158, %v1290
        %v1419 = vmul.f32 %v1160, %v1291
        %v1420 = vmul.f32 %v969, %v1292
        %v1421 = vmul.f32 %v971, %v1293
        %v1422 = vmul.f32 %v1162, %v1294
        %v1423 = vmul.f32 %v1164, %v1295
        %v1424 = vmul.f32 %v975, %v1296
        %v1425 = vmul.f32 %v977, %v1297
        %v1426 = vmul.f32 %v1168, %v1298
        %v1427 = vmul.f32 %v1170, %v1299
        %v1428 = vmul.f32 %v979, %v1300
        %v1429 = vmul.f32 %v981, %v1301
        %v1430 = vmul.f32 %v1172, %v1302
        %v1431 = vmul.f32 %v1174, %v1303
        %v1432 = vmul.f32 %v1304, 0.044715
        %v1433 = vmul.f32 %v1305, 0.044715
        %v1434 = vmul.f32 %v1306, 0.044715
        %v1435 = vmul.f32 %v1307, 0.044715
        %v1436 = vmul.f32 %v1308, 0.044715
        %v1437 = vmul.f32 %v1309, 0.044715
        %v1438 = vmul.f32 %v1310, 0.044715
        %v1439 = vmul.f32 %v1311, 0.044715
        %v1440 = vmul.f32 %v1312, 0.044715
        %v1441 = vmul.f32 %v1313, 0.044715
        %v1442 = vmul.f32 %v1314, 0.044715
        %v1443 = vmul.f32 %v1315, 0.044715
        %v1444 = vmul.f32 %v1316, 0.044715
        %v1445 = vmul.f32 %v1317, 0.044715
        %v1446 = vmul.f32 %v1318, 0.044715
        %v1447 = vmul.f32 %v1319, 0.044715
        %v1448 = vmul.f32 %v1320, 0.044715
        %v1449 = vmul.f32 %v1321, 0.044715
        %v1450 = vmul.f32 %v1322, 0.044715
        %v1451 = vmul.f32 %v1323, 0.044715
        %v1452 = vmul.f32 %v1324, 0.044715
        %v1453 = vmul.f32 %v1325, 0.044715
        %v1454 = vmul.f32 %v1326, 0.044715
        %v1455 = vmul.f32 %v1327, 0.044715
        %v1456 = vmul.f32 %v1328, 0.044715
        %v1457 = vmul.f32 %v1329, 0.044715
        %v1458 = vmul.f32 %v1330, 0.044715
        %v1459 = vmul.f32 %v1331, 0.044715
        %v1460 = vmul.f32 %v1332, 0.044715
        %v1461 = vmul.f32 %v1333, 0.044715
        %v1462 = vmul.f32 %v1334, 0.044715
        %v1463 = vmul.f32 %v1335, 0.044715
        %v1464 = vmul.f32 %v1336, 0.044715
        %v1465 = vmul.f32 %v1337, 0.044715
        %v1466 = vmul.f32 %v1338, 0.044715
        %v1467 = vmul.f32 %v1339, 0.044715
        %v1468 = vmul.f32 %v1340, 0.044715
        %v1469 = vmul.f32 %v1341, 0.044715
        %v1470 = vmul.f32 %v1342, 0.044715
        %v1471 = vmul.f32 %v1343, 0.044715
        %v1472 = vmul.f32 %v1344, 0.044715
        %v1473 = vmul.f32 %v1345, 0.044715
        %v1474 = vmul.f32 %v1346, 0.044715
        %v1475 = vmul.f32 %v1347, 0.044715
        %v1476 = vmul.f32 %v1348, 0.044715
        %v1477 = vmul.f32 %v1349, 0.044715
        %v1478 = vmul.f32 %v1350, 0.044715
        %v1479 = vmul.f32 %v1351, 0.044715
        %v1480 = vmul.f32 %v1352, 0.044715
        %v1481 = vmul.f32 %v1353, 0.044715
        %v1482 = vmul.f32 %v1354, 0.044715
        %v1483 = vmul.f32 %v1355, 0.044715
        %v1484 = vmul.f32 %v1356, 0.044715
        %v1485 = vmul.f32 %v1357, 0.044715
        %v1486 = vmul.f32 %v1358, 0.044715
        %v1487 = vmul.f32 %v1359, 0.044715
        %v1488 = vmul.f32 %v1360, 0.044715
        %v1489 = vmul.f32 %v1361, 0.044715
        %v1490 = vmul.f32 %v1362, 0.044715
        %v1491 = vmul.f32 %v1363, 0.044715
        %v1492 = vmul.f32 %v1364, 0.044715
        %v1493 = vmul.f32 %v1365, 0.044715
        %v1494 = vmul.f32 %v1366, 0.044715
        %v1495 = vmul.f32 %v1367, 0.044715
        %v1496 = vmul.f32 %v1368, 0.044715
        %v1497 = vmul.f32 %v1369, 0.044715
        %v1498 = vmul.f32 %v1370, 0.044715
        %v1499 = vmul.f32 %v1371, 0.044715
        %v1500 = vmul.f32 %v1372, 0.044715
        %v1501 = vmul.f32 %v1373, 0.044715
        %v1502 = vmul.f32 %v1374, 0.044715
        %v1503 = vmul.f32 %v1375, 0.044715
        %v1504 = vmul.f32 %v1376, 0.044715
        %v1505 = vmul.f32 %v1377, 0.044715
        %v1506 = vmul.f32 %v1378, 0.044715
        %v1507 = vmul.f32 %v1379, 0.044715
        %v1508 = vmul.f32 %v1380, 0.044715
        %v1509 = vmul.f32 %v1381, 0.044715
        %v1510 = vmul.f32 %v1382, 0.044715
        %v1511 = vmul.f32 %v1383, 0.044715
        %v1512 = vmul.f32 %v1384, 0.044715
        %v1513 = vmul.f32 %v1385, 0.044715
        %v1514 = vmul.f32 %v1386, 0.044715
        %v1515 = vmul.f32 %v1387, 0.044715
        %v1516 = vmul.f32 %v1388, 0.044715
        %v1517 = vmul.f32 %v1389, 0.044715
        %v1518 = vmul.f32 %v1390, 0.044715
        %v1519 = vmul.f32 %v1391, 0.044715
        %v1520 = vmul.f32 %v1392, 0.044715
        %v1521 = vmul.f32 %v1393, 0.044715
        %v1522 = vmul.f32 %v1394, 0.044715
        %v1523 = vmul.f32 %v1395, 0.044715
        %v1524 = vmul.f32 %v1396, 0.044715
        %v1525 = vmul.f32 %v1397, 0.044715
        %v1526 = vmul.f32 %v1398, 0.044715
        %v1527 = vmul.f32 %v1399, 0.044715
        %v1528 = vmul.f32 %v1400, 0.044715
        %v1529 = vmul.f32 %v1401, 0.044715
        %v1530 = vmul.f32 %v1402, 0.044715
        %v1531 = vmul.f32 %v1403, 0.044715
        %v1532 = vmul.f32 %v1404, 0.044715
        %v1533 = vmul.f32 %v1405, 0.044715
        %v1534 = vmul.f32 %v1406, 0.044715
        %v1535 = vmul.f32 %v1407, 0.044715
        %v1536 = vmul.f32 %v1408, 0.044715
        %v1537 = vmul.f32 %v1409, 0.044715
        %v1538 = vmul.f32 %v1410, 0.044715
        %v1539 = vmul.f32 %v1411, 0.044715
        %v1540 = vmul.f32 %v1412, 0.044715
        %v1541 = vmul.f32 %v1413, 0.044715
        %v1542 = vmul.f32 %v1414, 0.044715
        %v1543 = vmul.f32 %v1415, 0.044715
        %v1544 = vmul.f32 %v1416, 0.044715
        %v1545 = vmul.f32 %v1417, 0.044715
        %v1546 = vmul.f32 %v1418, 0.044715
        %v1547 = vmul.f32 %v1419, 0.044715
        %v1548 = vmul.f32 %v1420, 0.044715
        %v1549 = vmul.f32 %v1421, 0.044715
        %v1550 = vmul.f32 %v1422, 0.044715
        %v1551 = vmul.f32 %v1423, 0.044715
        %v1552 = vmul.f32 %v1424, 0.044715
        %v1553 = vmul.f32 %v1425, 0.044715
        %v1554 = vmul.f32 %v1426, 0.044715
        %v1555 = vmul.f32 %v1427, 0.044715
        %v1556 = vmul.f32 %v1428, 0.044715
        %v1557 = vmul.f32 %v1429, 0.044715
        %v1558 = vmul.f32 %v1430, 0.044715
        %v1559 = vmul.f32 %v1431, 0.044715
        %v1560 = vadd.f32 %v825, %v1432
        %v1561 = vadd.f32 %v827, %v1433
        %v1562 = vadd.f32 %v1018, %v1434
        %v1563 = vadd.f32 %v1020, %v1435
        %v1564 = vadd.f32 %v829, %v1436
        %v1565 = vadd.f32 %v831, %v1437
        %v1566 = vadd.f32 %v1022, %v1438
        %v1567 = vadd.f32 %v1024, %v1439
        %v1568 = vadd.f32 %v835, %v1440
        %v1569 = vadd.f32 %v837, %v1441
        %v1570 = vadd.f32 %v1028, %v1442
        %v1571 = vadd.f32 %v1030, %v1443
        %v1572 = vadd.f32 %v839, %v1444
        %v1573 = vadd.f32 %v841, %v1445
        %v1574 = vadd.f32 %v1032, %v1446
        %v1575 = vadd.f32 %v1034, %v1447
        %v1576 = vadd.f32 %v845, %v1448
        %v1577 = vadd.f32 %v847, %v1449
        %v1578 = vadd.f32 %v1038, %v1450
        %v1579 = vadd.f32 %v1040, %v1451
        %v1580 = vadd.f32 %v849, %v1452
        %v1581 = vadd.f32 %v851, %v1453
        %v1582 = vadd.f32 %v1042, %v1454
        %v1583 = vadd.f32 %v1044, %v1455
        %v1584 = vadd.f32 %v855, %v1456
        %v1585 = vadd.f32 %v857, %v1457
        %v1586 = vadd.f32 %v1048, %v1458
        %v1587 = vadd.f32 %v1050, %v1459
        %v1588 = vadd.f32 %v859, %v1460
        %v1589 = vadd.f32 %v861, %v1461
        %v1590 = vadd.f32 %v1052, %v1462
        %v1591 = vadd.f32 %v1054, %v1463
        %v1592 = vadd.f32 %v865, %v1464
        %v1593 = vadd.f32 %v867, %v1465
        %v1594 = vadd.f32 %v1058, %v1466
        %v1595 = vadd.f32 %v1060, %v1467
        %v1596 = vadd.f32 %v869, %v1468
        %v1597 = vadd.f32 %v871, %v1469
        %v1598 = vadd.f32 %v1062, %v1470
        %v1599 = vadd.f32 %v1064, %v1471
        %v1600 = vadd.f32 %v875, %v1472
        %v1601 = vadd.f32 %v877, %v1473
        %v1602 = vadd.f32 %v1068, %v1474
        %v1603 = vadd.f32 %v1070, %v1475
        %v1604 = vadd.f32 %v879, %v1476
        %v1605 = vadd.f32 %v881, %v1477
        %v1606 = vadd.f32 %v1072, %v1478
        %v1607 = vadd.f32 %v1074, %v1479
        %v1608 = vadd.f32 %v885, %v1480
        %v1609 = vadd.f32 %v887, %v1481
        %v1610 = vadd.f32 %v1078, %v1482
        %v1611 = vadd.f32 %v1080, %v1483
        %v1612 = vadd.f32 %v889, %v1484
        %v1613 = vadd.f32 %v891, %v1485
        %v1614 = vadd.f32 %v1082, %v1486
        %v1615 = vadd.f32 %v1084, %v1487
        %v1616 = vadd.f32 %v895, %v1488
        %v1617 = vadd.f32 %v897, %v1489
        %v1618 = vadd.f32 %v1088, %v1490
        %v1619 = vadd.f32 %v1090, %v1491
        %v1620 = vadd.f32 %v899, %v1492
        %v1621 = vadd.f32 %v901, %v1493
        %v1622 = vadd.f32 %v1092, %v1494
        %v1623 = vadd.f32 %v1094, %v1495
        %v1624 = vadd.f32 %v905, %v1496
        %v1625 = vadd.f32 %v907, %v1497
        %v1626 = vadd.f32 %v1098, %v1498
        %v1627 = vadd.f32 %v1100, %v1499
        %v1628 = vadd.f32 %v909, %v1500
        %v1629 = vadd.f32 %v911, %v1501
        %v1630 = vadd.f32 %v1102, %v1502
        %v1631 = vadd.f32 %v1104, %v1503
        %v1632 = vadd.f32 %v915, %v1504
        %v1633 = vadd.f32 %v917, %v1505
        %v1634 = vadd.f32 %v1108, %v1506
        %v1635 = vadd.f32 %v1110, %v1507
        %v1636 = vadd.f32 %v919, %v1508
        %v1637 = vadd.f32 %v921, %v1509
        %v1638 = vadd.f32 %v1112, %v1510
        %v1639 = vadd.f32 %v1114, %v1511
        %v1640 = vadd.f32 %v925, %v1512
        %v1641 = vadd.f32 %v927, %v1513
        %v1642 = vadd.f32 %v1118, %v1514
        %v1643 = vadd.f32 %v1120, %v1515
        %v1644 = vadd.f32 %v929, %v1516
        %v1645 = vadd.f32 %v931, %v1517
        %v1646 = vadd.f32 %v1122, %v1518
        %v1647 = vadd.f32 %v1124, %v1519
        %v1648 = vadd.f32 %v935, %v1520
        %v1649 = vadd.f32 %v937, %v1521
        %v1650 = vadd.f32 %v1128, %v1522
        %v1651 = vadd.f32 %v1130, %v1523
        %v1652 = vadd.f32 %v939, %v1524
        %v1653 = vadd.f32 %v941, %v1525
        %v1654 = vadd.f32 %v1132, %v1526
        %v1655 = vadd.f32 %v1134, %v1527
        %v1656 = vadd.f32 %v945, %v1528
        %v1657 = vadd.f32 %v947, %v1529
        %v1658 = vadd.f32 %v1138, %v1530
        %v1659 = vadd.f32 %v1140, %v1531
        %v1660 = vadd.f32 %v949, %v1532
        %v1661 = vadd.f32 %v951, %v1533
        %v1662 = vadd.f32 %v1142, %v1534
        %v1663 = vadd.f32 %v1144, %v1535
        %v1664 = vadd.f32 %v955, %v1536
        %v1665 = vadd.f32 %v957, %v1537
        %v1666 = vadd.f32 %v1148, %v1538
        %v1667 = vadd.f32 %v1150, %v1539
        %v1668 = vadd.f32 %v959, %v1540
        %v1669 = vadd.f32 %v961, %v1541
        %v1670 = vadd.f32 %v1152, %v1542
        %v1671 = vadd.f32 %v1154, %v1543
        %v1672 = vadd.f32 %v965, %v1544
        %v1673 = vadd.f32 %v967, %v1545
        %v1674 = vadd.f32 %v1158, %v1546
        %v1675 = vadd.f32 %v1160, %v1547
        %v1676 = vadd.f32 %v969, %v1548
        %v1677 = vadd.f32 %v971, %v1549
        %v1678 = vadd.f32 %v1162, %v1550
        %v1679 = vadd.f32 %v1164, %v1551
        %v1680 = vadd.f32 %v975, %v1552
        %v1681 = vadd.f32 %v977, %v1553
        %v1682 = vadd.f32 %v1168, %v1554
        %v1683 = vadd.f32 %v1170, %v1555
        %v1684 = vadd.f32 %v979, %v1556
        %v1685 = vadd.f32 %v981, %v1557
        %v1686 = vadd.f32 %v1172, %v1558
        %v1687 = vadd.f32 %v1174, %v1559
        %v1688 = vmul.f32 %v1560, 0.7978846
        %v1689 = vmul.f32 %v1561, 0.7978846
        %v1690 = vmul.f32 %v1562, 0.7978846
        %v1691 = vmul.f32 %v1563, 0.7978846
        %v1692 = vmul.f32 %v1564, 0.7978846
        %v1693 = vmul.f32 %v1565, 0.7978846
        %v1694 = vmul.f32 %v1566, 0.7978846
        %v1695 = vmul.f32 %v1567, 0.7978846
        %v1696 = vmul.f32 %v1568, 0.7978846
        %v1697 = vmul.f32 %v1569, 0.7978846
        %v1698 = vmul.f32 %v1570, 0.7978846
        %v1699 = vmul.f32 %v1571, 0.7978846
        %v1700 = vmul.f32 %v1572, 0.7978846
        %v1701 = vmul.f32 %v1573, 0.7978846
        %v1702 = vmul.f32 %v1574, 0.7978846
        %v1703 = vmul.f32 %v1575, 0.7978846
        %v1704 = vmul.f32 %v1576, 0.7978846
        %v1705 = vmul.f32 %v1577, 0.7978846
        %v1706 = vmul.f32 %v1578, 0.7978846
        %v1707 = vmul.f32 %v1579, 0.7978846
        %v1708 = vmul.f32 %v1580, 0.7978846
        %v1709 = vmul.f32 %v1581, 0.7978846
        %v1710 = vmul.f32 %v1582, 0.7978846
        %v1711 = vmul.f32 %v1583, 0.7978846
        %v1712 = vmul.f32 %v1584, 0.7978846
        %v1713 = vmul.f32 %v1585, 0.7978846
        %v1714 = vmul.f32 %v1586, 0.7978846
        %v1715 = vmul.f32 %v1587, 0.7978846
        %v1716 = vmul.f32 %v1588, 0.7978846
        %v1717 = vmul.f32 %v1589, 0.7978846
        %v1718 = vmul.f32 %v1590, 0.7978846
        %v1719 = vmul.f32 %v1591, 0.7978846
        %v1720 = vmul.f32 %v1592, 0.7978846
        %v1721 = vmul.f32 %v1593, 0.7978846
        %v1722 = vmul.f32 %v1594, 0.7978846
        %v1723 = vmul.f32 %v1595, 0.7978846
        %v1724 = vmul.f32 %v1596, 0.7978846
        %v1725 = vmul.f32 %v1597, 0.7978846
        %v1726 = vmul.f32 %v1598, 0.7978846
        %v1727 = vmul.f32 %v1599, 0.7978846
        %v1728 = vmul.f32 %v1600, 0.7978846
        %v1729 = vmul.f32 %v1601, 0.7978846
        %v1730 = vmul.f32 %v1602, 0.7978846
        %v1731 = vmul.f32 %v1603, 0.7978846
        %v1732 = vmul.f32 %v1604, 0.7978846
        %v1733 = vmul.f32 %v1605, 0.7978846
        %v1734 = vmul.f32 %v1606, 0.7978846
        %v1735 = vmul.f32 %v1607, 0.7978846
        %v1736 = vmul.f32 %v1608, 0.7978846
        %v1737 = vmul.f32 %v1609, 0.7978846
        %v1738 = vmul.f32 %v1610, 0.7978846
        %v1739 = vmul.f32 %v1611, 0.7978846
        %v1740 = vmul.f32 %v1612, 0.7978846
        %v1741 = vmul.f32 %v1613, 0.7978846
        %v1742 = vmul.f32 %v1614, 0.7978846
        %v1743 = vmul.f32 %v1615, 0.7978846
        %v1744 = vmul.f32 %v1616, 0.7978846
        %v1745 = vmul.f32 %v1617, 0.7978846
        %v1746 = vmul.f32 %v1618, 0.7978846
        %v1747 = vmul.f32 %v1619, 0.7978846
        %v1748 = vmul.f32 %v1620, 0.7978846
        %v1749 = vmul.f32 %v1621, 0.7978846
        %v1750 = vmul.f32 %v1622, 0.7978846
        %v1751 = vmul.f32 %v1623, 0.7978846
        %v1752 = vmul.f32 %v1624, 0.7978846
        %v1753 = vmul.f32 %v1625, 0.7978846
        %v1754 = vmul.f32 %v1626, 0.7978846
        %v1755 = vmul.f32 %v1627, 0.7978846
        %v1756 = vmul.f32 %v1628, 0.7978846
        %v1757 = vmul.f32 %v1629, 0.7978846
        %v1758 = vmul.f32 %v1630, 0.7978846
        %v1759 = vmul.f32 %v1631, 0.7978846
        %v1760 = vmul.f32 %v1632, 0.7978846
        %v1761 = vmul.f32 %v1633, 0.7978846
        %v1762 = vmul.f32 %v1634, 0.7978846
        %v1763 = vmul.f32 %v1635, 0.7978846
        %v1764 = vmul.f32 %v1636, 0.7978846
        %v1765 = vmul.f32 %v1637, 0.7978846
        %v1766 = vmul.f32 %v1638, 0.7978846
        %v1767 = vmul.f32 %v1639, 0.7978846
        %v1768 = vmul.f32 %v1640, 0.7978846
        %v1769 = vmul.f32 %v1641, 0.7978846
        %v1770 = vmul.f32 %v1642, 0.7978846
        %v1771 = vmul.f32 %v1643, 0.7978846
        %v1772 = vmul.f32 %v1644, 0.7978846
        %v1773 = vmul.f32 %v1645, 0.7978846
        %v1774 = vmul.f32 %v1646, 0.7978846
        %v1775 = vmul.f32 %v1647, 0.7978846
        %v1776 = vmul.f32 %v1648, 0.7978846
        %v1777 = vmul.f32 %v1649, 0.7978846
        %v1778 = vmul.f32 %v1650, 0.7978846
        %v1779 = vmul.f32 %v1651, 0.7978846
        %v1780 = vmul.f32 %v1652, 0.7978846
        %v1781 = vmul.f32 %v1653, 0.7978846
        %v1782 = vmul.f32 %v1654, 0.7978846
        %v1783 = vmul.f32 %v1655, 0.7978846
        %v1784 = vmul.f32 %v1656, 0.7978846
        %v1785 = vmul.f32 %v1657, 0.7978846
        %v1786 = vmul.f32 %v1658, 0.7978846
        %v1787 = vmul.f32 %v1659, 0.7978846
        %v1788 = vmul.f32 %v1660, 0.7978846
        %v1789 = vmul.f32 %v1661, 0.7978846
        %v1790 = vmul.f32 %v1662, 0.7978846
        %v1791 = vmul.f32 %v1663, 0.7978846
        %v1792 = vmul.f32 %v1664, 0.7978846
        %v1793 = vmul.f32 %v1665, 0.7978846
        %v1794 = vmul.f32 %v1666, 0.7978846
        %v1795 = vmul.f32 %v1667, 0.7978846
        %v1796 = vmul.f32 %v1668, 0.7978846
        %v1797 = vmul.f32 %v1669, 0.7978846
        %v1798 = vmul.f32 %v1670, 0.7978846
        %v1799 = vmul.f32 %v1671, 0.7978846
        %v1800 = vmul.f32 %v1672, 0.7978846
        %v1801 = vmul.f32 %v1673, 0.7978846
        %v1802 = vmul.f32 %v1674, 0.7978846
        %v1803 = vmul.f32 %v1675, 0.7978846
        %v1804 = vmul.f32 %v1676, 0.7978846
        %v1805 = vmul.f32 %v1677, 0.7978846
        %v1806 = vmul.f32 %v1678, 0.7978846
        %v1807 = vmul.f32 %v1679, 0.7978846
        %v1808 = vmul.f32 %v1680, 0.7978846
        %v1809 = vmul.f32 %v1681, 0.7978846
        %v1810 = vmul.f32 %v1682, 0.7978846
        %v1811 = vmul.f32 %v1683, 0.7978846
        %v1812 = vmul.f32 %v1684, 0.7978846
        %v1813 = vmul.f32 %v1685, 0.7978846
        %v1814 = vmul.f32 %v1686, 0.7978846
        %v1815 = vmul.f32 %v1687, 0.7978846
        %v1816 = vtanh.pop %v1688
        %v1817 = vtanh.pop %v1689
        %v1818 = vtanh.pop %v1690
        %v1819 = vtanh.pop %v1691
        %v1820 = vtanh.pop %v1692
        %v1821 = vtanh.pop %v1693
        %v1822 = vtanh.pop %v1694
        %v1823 = vtanh.pop %v1695
        %v1824 = vtanh.pop %v1696
        %v1825 = vtanh.pop %v1697
        %v1826 = vtanh.pop %v1698
        %v1827 = vtanh.pop %v1699
        %v1828 = vtanh.pop %v1700
        %v1829 = vtanh.pop %v1701
        %v1830 = vtanh.pop %v1702
        %v1831 = vtanh.pop %v1703
        %v1832 = vtanh.pop %v1704
        %v1833 = vtanh.pop %v1705
        %v1834 = vtanh.pop %v1706
        %v1835 = vtanh.pop %v1707
        %v1836 = vtanh.pop %v1708
        %v1837 = vtanh.pop %v1709
        %v1838 = vtanh.pop %v1710
        %v1839 = vtanh.pop %v1711
        %v1840 = vtanh.pop %v1712
        %v1841 = vtanh.pop %v1713
        %v1842 = vtanh.pop %v1714
        %v1843 = vtanh.pop %v1715
        %v1844 = vtanh.pop %v1716
        %v1845 = vtanh.pop %v1717
        %v1846 = vtanh.pop %v1718
        %v1847 = vtanh.pop %v1719
        %v1848 = vtanh.pop %v1720
        %v1849 = vtanh.pop %v1721
        %v1850 = vtanh.pop %v1722
        %v1851 = vtanh.pop %v1723
        %v1852 = vtanh.pop %v1724
        %v1853 = vtanh.pop %v1725
        %v1854 = vtanh.pop %v1726
        %v1855 = vtanh.pop %v1727
        %v1856 = vtanh.pop %v1728
        %v1857 = vtanh.pop %v1729
        %v1858 = vtanh.pop %v1730
        %v1859 = vtanh.pop %v1731
        %v1860 = vtanh.pop %v1732
        %v1861 = vtanh.pop %v1733
        %v1862 = vtanh.pop %v1734
        %v1863 = vtanh.pop %v1735
        %v1864 = vtanh.pop %v1736
        %v1865 = vtanh.pop %v1737
        %v1866 = vtanh.pop %v1738
        %v1867 = vtanh.pop %v1739
        %v1868 = vtanh.pop %v1740
        %v1869 = vtanh.pop %v1741
        %v1870 = vtanh.pop %v1742
        %v1871 = vtanh.pop %v1743
        %v1872 = vtanh.pop %v1744
        %v1873 = vtanh.pop %v1745
        %v1874 = vtanh.pop %v1746
        %v1875 = vtanh.pop %v1747
        %v1876 = vtanh.pop %v1748
        %v1877 = vtanh.pop %v1749
        %v1878 = vtanh.pop %v1750
        %v1879 = vtanh.pop %v1751
        %v1880 = vtanh.pop %v1752
        %v1881 = vtanh.pop %v1753
        %v1882 = vtanh.pop %v1754
        %v1883 = vtanh.pop %v1755
        %v1884 = vtanh.pop %v1756
        %v1885 = vtanh.pop %v1757
        %v1886 = vtanh.pop %v1758
        %v1887 = vtanh.pop %v1759
        %v1888 = vtanh.pop %v1760
        %v1889 = vtanh.pop %v1761
        %v1890 = vtanh.pop %v1762
        %v1891 = vtanh.pop %v1763
        %v1892 = vtanh.pop %v1764
        %v1893 = vtanh.pop %v1765
        %v1894 = vtanh.pop %v1766
        %v1895 = vtanh.pop %v1767
        %v1896 = vtanh.pop %v1768
        %v1897 = vtanh.pop %v1769
        %v1898 = vtanh.pop %v1770
        %v1899 = vtanh.pop %v1771
        %v1900 = vtanh.pop %v1772
        %v1901 = vtanh.pop %v1773
        %v1902 = vtanh.pop %v1774
        %v1903 = vtanh.pop %v1775
        %v1904 = vtanh.pop %v1776
        %v1905 = vtanh.pop %v1777
        %v1906 = vtanh.pop %v1778
        %v1907 = vtanh.pop %v1779
        %v1908 = vtanh.pop %v1780
        %v1909 = vtanh.pop %v1781
        %v1910 = vtanh.pop %v1782
        %v1911 = vtanh.pop %v1783
        %v1912 = vtanh.pop %v1784
        %v1913 = vtanh.pop %v1785
        %v1914 = vtanh.pop %v1786
        %v1915 = vtanh.pop %v1787
        %v1916 = vtanh.pop %v1788
        %v1917 = vtanh.pop %v1789
        %v1918 = vtanh.pop %v1790
        %v1919 = vtanh.pop %v1791
        %v1920 = vtanh.pop %v1792
        %v1921 = vtanh.pop %v1793
        %v1922 = vtanh.pop %v1794
        %v1923 = vtanh.pop %v1795
        %v1924 = vtanh.pop %v1796
        %v1925 = vtanh.pop %v1797
        %v1926 = vtanh.pop %v1798
        %v1927 = vtanh.pop %v1799
        %v1928 = vtanh.pop %v1800
        %v1929 = vtanh.pop %v1801
        %v1930 = vtanh.pop %v1802
        %v1931 = vtanh.pop %v1803
        %v1932 = vtanh.pop %v1804
        %v1933 = vtanh.pop %v1805
        %v1934 = vtanh.pop %v1806
        %v1935 = vtanh.pop %v1807
        %v1936 = vtanh.pop %v1808
        %v1937 = vtanh.pop %v1809
        %v1938 = vtanh.pop %v1810
        %v1939 = vtanh.pop %v1811
        %v1940 = vtanh.pop %v1812
        %v1941 = vtanh.pop %v1813
        %v1942 = vtanh.pop %v1814
        %v1943 = vtanh.pop %v1815
        %v1944 = vadd.f32 %v1816, 1.0
        %v1945 = vadd.f32 %v1817, 1.0
        %v1946 = vadd.f32 %v1818, 1.0
        %v1947 = vadd.f32 %v1819, 1.0
        %v1948 = vadd.f32 %v1820, 1.0
        %v1949 = vadd.f32 %v1821, 1.0
        %v1950 = vadd.f32 %v1822, 1.0
        %v1951 = vadd.f32 %v1823, 1.0
        %v1952 = vadd.f32 %v1824, 1.0
        %v1953 = vadd.f32 %v1825, 1.0
        %v1954 = vadd.f32 %v1826, 1.0
        %v1955 = vadd.f32 %v1827, 1.0
        %v1956 = vadd.f32 %v1828, 1.0
        %v1957 = vadd.f32 %v1829, 1.0
        %v1958 = vadd.f32 %v1830, 1.0
        %v1959 = vadd.f32 %v1831, 1.0
        %v1960 = vadd.f32 %v1832, 1.0
        %v1961 = vadd.f32 %v1833, 1.0
        %v1962 = vadd.f32 %v1834, 1.0
        %v1963 = vadd.f32 %v1835, 1.0
        %v1964 = vadd.f32 %v1836, 1.0
        %v1965 = vadd.f32 %v1837, 1.0
        %v1966 = vadd.f32 %v1838, 1.0
        %v1967 = vadd.f32 %v1839, 1.0
        %v1968 = vadd.f32 %v1840, 1.0
        %v1969 = vadd.f32 %v1841, 1.0
        %v1970 = vadd.f32 %v1842, 1.0
        %v1971 = vadd.f32 %v1843, 1.0
        %v1972 = vadd.f32 %v1844, 1.0
        %v1973 = vadd.f32 %v1845, 1.0
        %v1974 = vadd.f32 %v1846, 1.0
        %v1975 = vadd.f32 %v1847, 1.0
        %v1976 = vadd.f32 %v1848, 1.0
        %v1977 = vadd.f32 %v1849, 1.0
        %v1978 = vadd.f32 %v1850, 1.0
        %v1979 = vadd.f32 %v1851, 1.0
        %v1980 = vadd.f32 %v1852, 1.0
        %v1981 = vadd.f32 %v1853, 1.0
        %v1982 = vadd.f32 %v1854, 1.0
        %v1983 = vadd.f32 %v1855, 1.0
        %v1984 = vadd.f32 %v1856, 1.0
        %v1985 = vadd.f32 %v1857, 1.0
        %v1986 = vadd.f32 %v1858, 1.0
        %v1987 = vadd.f32 %v1859, 1.0
        %v1988 = vadd.f32 %v1860, 1.0
        %v1989 = vadd.f32 %v1861, 1.0
        %v1990 = vadd.f32 %v1862, 1.0
        %v1991 = vadd.f32 %v1863, 1.0
        %v1992 = vadd.f32 %v1864, 1.0
        %v1993 = vadd.f32 %v1865, 1.0
        %v1994 = vadd.f32 %v1866, 1.0
        %v1995 = vadd.f32 %v1867, 1.0
        %v1996 = vadd.f32 %v1868, 1.0
        %v1997 = vadd.f32 %v1869, 1.0
        %v1998 = vadd.f32 %v1870, 1.0
        %v1999 = vadd.f32 %v1871, 1.0
        %v2000 = vadd.f32 %v1872, 1.0
        %v2001 = vadd.f32 %v1873, 1.0
        %v2002 = vadd.f32 %v1874, 1.0
        %v2003 = vadd.f32 %v1875, 1.0
        %v2004 = vadd.f32 %v1876, 1.0
        %v2005 = vadd.f32 %v1877, 1.0
        %v2006 = vadd.f32 %v1878, 1.0
        %v2007 = vadd.f32 %v1879, 1.0
        %v2008 = vadd.f32 %v1880, 1.0
        %v2009 = vadd.f32 %v1881, 1.0
        %v2010 = vadd.f32 %v1882, 1.0
        %v2011 = vadd.f32 %v1883, 1.0
        %v2012 = vadd.f32 %v1884, 1.0
        %v2013 = vadd.f32 %v1885, 1.0
        %v2014 = vadd.f32 %v1886, 1.0
        %v2015 = vadd.f32 %v1887, 1.0
        %v2016 = vadd.f32 %v1888, 1.0
        %v2017 = vadd.f32 %v1889, 1.0
        %v2018 = vadd.f32 %v1890, 1.0
        %v2019 = vadd.f32 %v1891, 1.0
        %v2020 = vadd.f32 %v1892, 1.0
        %v2021 = vadd.f32 %v1893, 1.0
        %v2022 = vadd.f32 %v1894, 1.0
        %v2023 = vadd.f32 %v1895, 1.0
        %v2024 = vadd.f32 %v1896, 1.0
        %v2025 = vadd.f32 %v1897, 1.0
        %v2026 = vadd.f32 %v1898, 1.0
        %v2027 = vadd.f32 %v1899, 1.0
        %v2028 = vadd.f32 %v1900, 1.0
        %v2029 = vadd.f32 %v1901, 1.0
        %v2030 = vadd.f32 %v1902, 1.0
        %v2031 = vadd.f32 %v1903, 1.0
        %v2032 = vadd.f32 %v1904, 1.0
        %v2033 = vadd.f32 %v1905, 1.0
        %v2034 = vadd.f32 %v1906, 1.0
        %v2035 = vadd.f32 %v1907, 1.0
        %v2036 = vadd.f32 %v1908, 1.0
        %v2037 = vadd.f32 %v1909, 1.0
        %v2038 = vadd.f32 %v1910, 1.0
        %v2039 = vadd.f32 %v1911, 1.0
        %v2040 = vadd.f32 %v1912, 1.0
        %v2041 = vadd.f32 %v1913, 1.0
        %v2042 = vadd.f32 %v1914, 1.0
        %v2043 = vadd.f32 %v1915, 1.0
        %v2044 = vadd.f32 %v1916, 1.0
        %v2045 = vadd.f32 %v1917, 1.0
        %v2046 = vadd.f32 %v1918, 1.0
        %v2047 = vadd.f32 %v1919, 1.0
        %v2048 = vadd.f32 %v1920, 1.0
        %v2049 = vadd.f32 %v1921, 1.0
        %v2050 = vadd.f32 %v1922, 1.0
        %v2051 = vadd.f32 %v1923, 1.0
        %v2052 = vadd.f32 %v1924, 1.0
        %v2053 = vadd.f32 %v1925, 1.0
        %v2054 = vadd.f32 %v1926, 1.0
        %v2055 = vadd.f32 %v1927, 1.0
        %v2056 = vadd.f32 %v1928, 1.0
        %v2057 = vadd.f32 %v1929, 1.0
        %v2058 = vadd.f32 %v1930, 1.0
        %v2059 = vadd.f32 %v1931, 1.0
        %v2060 = vadd.f32 %v1932, 1.0
        %v2061 = vadd.f32 %v1933, 1.0
        %v2062 = vadd.f32 %v1934, 1.0
        %v2063 = vadd.f32 %v1935, 1.0
        %v2064 = vadd.f32 %v1936, 1.0
        %v2065 = vadd.f32 %v1937, 1.0
        %v2066 = vadd.f32 %v1938, 1.0
        %v2067 = vadd.f32 %v1939, 1.0
        %v2068 = vadd.f32 %v1940, 1.0
        %v2069 = vadd.f32 %v1941, 1.0
        %v2070 = vadd.f32 %v1942, 1.0
        %v2071 = vadd.f32 %v1943, 1.0
        %v2072 = vmul.f32 %v1944, 0.5
        %v2073 = vmul.f32 %v1945, 0.5
        %v2074 = vmul.f32 %v1946, 0.5
        %v2075 = vmul.f32 %v1947, 0.5
        %v2076 = vmul.f32 %v1948, 0.5
        %v2077 = vmul.f32 %v1949, 0.5
        %v2078 = vmul.f32 %v1950, 0.5
        %v2079 = vmul.f32 %v1951, 0.5
        %v2080 = vmul.f32 %v1952, 0.5
        %v2081 = vmul.f32 %v1953, 0.5
        %v2082 = vmul.f32 %v1954, 0.5
        %v2083 = vmul.f32 %v1955, 0.5
        %v2084 = vmul.f32 %v1956, 0.5
        %v2085 = vmul.f32 %v1957, 0.5
        %v2086 = vmul.f32 %v1958, 0.5
        %v2087 = vmul.f32 %v1959, 0.5
        %v2088 = vmul.f32 %v1960, 0.5
        %v2089 = vmul.f32 %v1961, 0.5
        %v2090 = vmul.f32 %v1962, 0.5
        %v2091 = vmul.f32 %v1963, 0.5
        %v2092 = vmul.f32 %v1964, 0.5
        %v2093 = vmul.f32 %v1965, 0.5
        %v2094 = vmul.f32 %v1966, 0.5
        %v2095 = vmul.f32 %v1967, 0.5
        %v2096 = vmul.f32 %v1968, 0.5
        %v2097 = vmul.f32 %v1969, 0.5
        %v2098 = vmul.f32 %v1970, 0.5
        %v2099 = vmul.f32 %v1971, 0.5
        %v2100 = vmul.f32 %v1972, 0.5
        %v2101 = vmul.f32 %v1973, 0.5
        %v2102 = vmul.f32 %v1974, 0.5
        %v2103 = vmul.f32 %v1975, 0.5
        %v2104 = vmul.f32 %v1976, 0.5
        %v2105 = vmul.f32 %v1977, 0.5
        %v2106 = vmul.f32 %v1978, 0.5
        %v2107 = vmul.f32 %v1979, 0.5
        %v2108 = vmul.f32 %v1980, 0.5
        %v2109 = vmul.f32 %v1981, 0.5
        %v2110 = vmul.f32 %v1982, 0.5
        %v2111 = vmul.f32 %v1983, 0.5
        %v2112 = vmul.f32 %v1984, 0.5
        %v2113 = vmul.f32 %v1985, 0.5
        %v2114 = vmul.f32 %v1986, 0.5
        %v2115 = vmul.f32 %v1987, 0.5
        %v2116 = vmul.f32 %v1988, 0.5
        %v2117 = vmul.f32 %v1989, 0.5
        %v2118 = vmul.f32 %v1990, 0.5
        %v2119 = vmul.f32 %v1991, 0.5
        %v2120 = vmul.f32 %v1992, 0.5
        %v2121 = vmul.f32 %v1993, 0.5
        %v2122 = vmul.f32 %v1994, 0.5
        %v2123 = vmul.f32 %v1995, 0.5
        %v2124 = vmul.f32 %v1996, 0.5
        %v2125 = vmul.f32 %v1997, 0.5
        %v2126 = vmul.f32 %v1998, 0.5
        %v2127 = vmul.f32 %v1999, 0.5
        %v2128 = vmul.f32 %v2000, 0.5
        %v2129 = vmul.f32 %v2001, 0.5
        %v2130 = vmul.f32 %v2002, 0.5
        %v2131 = vmul.f32 %v2003, 0.5
        %v2132 = vmul.f32 %v2004, 0.5
        %v2133 = vmul.f32 %v2005, 0.5
        %v2134 = vmul.f32 %v2006, 0.5
        %v2135 = vmul.f32 %v2007, 0.5
        %v2136 = vmul.f32 %v2008, 0.5
        %v2137 = vmul.f32 %v2009, 0.5
        %v2138 = vmul.f32 %v2010, 0.5
        %v2139 = vmul.f32 %v2011, 0.5
        %v2140 = vmul.f32 %v2012, 0.5
        %v2141 = vmul.f32 %v2013, 0.5
        %v2142 = vmul.f32 %v2014, 0.5
        %v2143 = vmul.f32 %v2015, 0.5
        %v2144 = vmul.f32 %v2016, 0.5
        %v2145 = vmul.f32 %v2017, 0.5
        %v2146 = vmul.f32 %v2018, 0.5
        %v2147 = vmul.f32 %v2019, 0.5
        %v2148 = vmul.f32 %v2020, 0.5
        %v2149 = vmul.f32 %v2021, 0.5
        %v2150 = vmul.f32 %v2022, 0.5
        %v2151 = vmul.f32 %v2023, 0.5
        %v2152 = vmul.f32 %v2024, 0.5
        %v2153 = vmul.f32 %v2025, 0.5
        %v2154 = vmul.f32 %v2026, 0.5
        %v2155 = vmul.f32 %v2027, 0.5
        %v2156 = vmul.f32 %v2028, 0.5
        %v2157 = vmul.f32 %v2029, 0.5
        %v2158 = vmul.f32 %v2030, 0.5
        %v2159 = vmul.f32 %v2031, 0.5
        %v2160 = vmul.f32 %v2032, 0.5
        %v2161 = vmul.f32 %v2033, 0.5
        %v2162 = vmul.f32 %v2034, 0.5
        %v2163 = vmul.f32 %v2035, 0.5
        %v2164 = vmul.f32 %v2036, 0.5
        %v2165 = vmul.f32 %v2037, 0.5
        %v2166 = vmul.f32 %v2038, 0.5
        %v2167 = vmul.f32 %v2039, 0.5
        %v2168 = vmul.f32 %v2040, 0.5
        %v2169 = vmul.f32 %v2041, 0.5
        %v2170 = vmul.f32 %v2042, 0.5
        %v2171 = vmul.f32 %v2043, 0.5
        %v2172 = vmul.f32 %v2044, 0.5
        %v2173 = vmul.f32 %v2045, 0.5
        %v2174 = vmul.f32 %v2046, 0.5
        %v2175 = vmul.f32 %v2047, 0.5
        %v2176 = vmul.f32 %v2048, 0.5
        %v2177 = vmul.f32 %v2049, 0.5
        %v2178 = vmul.f32 %v2050, 0.5
        %v2179 = vmul.f32 %v2051, 0.5
        %v2180 = vmul.f32 %v2052, 0.5
        %v2181 = vmul.f32 %v2053, 0.5
        %v2182 = vmul.f32 %v2054, 0.5
        %v2183 = vmul.f32 %v2055, 0.5
        %v2184 = vmul.f32 %v2056, 0.5
        %v2185 = vmul.f32 %v2057, 0.5
        %v2186 = vmul.f32 %v2058, 0.5
        %v2187 = vmul.f32 %v2059, 0.5
        %v2188 = vmul.f32 %v2060, 0.5
        %v2189 = vmul.f32 %v2061, 0.5
        %v2190 = vmul.f32 %v2062, 0.5
        %v2191 = vmul.f32 %v2063, 0.5
        %v2192 = vmul.f32 %v2064, 0.5
        %v2193 = vmul.f32 %v2065, 0.5
        %v2194 = vmul.f32 %v2066, 0.5
        %v2195 = vmul.f32 %v2067, 0.5
        %v2196 = vmul.f32 %v2068, 0.5
        %v2197 = vmul.f32 %v2069, 0.5
        %v2198 = vmul.f32 %v2070, 0.5
        %v2199 = vmul.f32 %v2071, 0.5
        %v2200 = vmul.f32 %v825, %v2072
        %v2201 = vmul.f32 %v827, %v2073
        %v2202 = vmul.f32 %v1018, %v2074
        %v2203 = vmul.f32 %v1020, %v2075
        %v2204 = vmul.f32 %v829, %v2076
        %v2205 = vmul.f32 %v831, %v2077
        %v2206 = vmul.f32 %v1022, %v2078
        %v2207 = vmul.f32 %v1024, %v2079
        %v2208 = vmul.f32 %v835, %v2080
        %v2209 = vmul.f32 %v837, %v2081
        %v2210 = vmul.f32 %v1028, %v2082
        %v2211 = vmul.f32 %v1030, %v2083
        %v2212 = vmul.f32 %v839, %v2084
        %v2213 = vmul.f32 %v841, %v2085
        %v2214 = vmul.f32 %v1032, %v2086
        %v2215 = vmul.f32 %v1034, %v2087
        %v2216 = vmul.f32 %v845, %v2088
        %v2217 = vmul.f32 %v847, %v2089
        %v2218 = vmul.f32 %v1038, %v2090
        %v2219 = vmul.f32 %v1040, %v2091
        %v2220 = vmul.f32 %v849, %v2092
        %v2221 = vmul.f32 %v851, %v2093
        %v2222 = vmul.f32 %v1042, %v2094
        %v2223 = vmul.f32 %v1044, %v2095
        %v2224 = vmul.f32 %v855, %v2096
        %v2225 = vmul.f32 %v857, %v2097
        %v2226 = vmul.f32 %v1048, %v2098
        %v2227 = vmul.f32 %v1050, %v2099
        %v2228 = vmul.f32 %v859, %v2100
        %v2229 = vmul.f32 %v861, %v2101
        %v2230 = vmul.f32 %v1052, %v2102
        %v2231 = vmul.f32 %v1054, %v2103
        %v2232 = vmul.f32 %v865, %v2104
        %v2233 = vmul.f32 %v867, %v2105
        %v2234 = vmul.f32 %v1058, %v2106
        %v2235 = vmul.f32 %v1060, %v2107
        %v2236 = vmul.f32 %v869, %v2108
        %v2237 = vmul.f32 %v871, %v2109
        %v2238 = vmul.f32 %v1062, %v2110
        %v2239 = vmul.f32 %v1064, %v2111
        %v2240 = vmul.f32 %v875, %v2112
        %v2241 = vmul.f32 %v877, %v2113
        %v2242 = vmul.f32 %v1068, %v2114
        %v2243 = vmul.f32 %v1070, %v2115
        %v2244 = vmul.f32 %v879, %v2116
        %v2245 = vmul.f32 %v881, %v2117
        %v2246 = vmul.f32 %v1072, %v2118
        %v2247 = vmul.f32 %v1074, %v2119
        %v2248 = vmul.f32 %v885, %v2120
        %v2249 = vmul.f32 %v887, %v2121
        %v2250 = vmul.f32 %v1078, %v2122
        %v2251 = vmul.f32 %v1080, %v2123
        %v2252 = vmul.f32 %v889, %v2124
        %v2253 = vmul.f32 %v891, %v2125
        %v2254 = vmul.f32 %v1082, %v2126
        %v2255 = vmul.f32 %v1084, %v2127
        %v2256 = vmul.f32 %v895, %v2128
        %v2257 = vmul.f32 %v897, %v2129
        %v2258 = vmul.f32 %v1088, %v2130
        %v2259 = vmul.f32 %v1090, %v2131
        %v2260 = vmul.f32 %v899, %v2132
        %v2261 = vmul.f32 %v901, %v2133
        %v2262 = vmul.f32 %v1092, %v2134
        %v2263 = vmul.f32 %v1094, %v2135
        %v2264 = vmul.f32 %v905, %v2136
        %v2265 = vmul.f32 %v907, %v2137
        %v2266 = vmul.f32 %v1098, %v2138
        %v2267 = vmul.f32 %v1100, %v2139
        %v2268 = vmul.f32 %v909, %v2140
        %v2269 = vmul.f32 %v911, %v2141
        %v2270 = vmul.f32 %v1102, %v2142
        %v2271 = vmul.f32 %v1104, %v2143
        %v2272 = vmul.f32 %v915, %v2144
        %v2273 = vmul.f32 %v917, %v2145
        %v2274 = vmul.f32 %v1108, %v2146
        %v2275 = vmul.f32 %v1110, %v2147
        %v2276 = vmul.f32 %v919, %v2148
        %v2277 = vmul.f32 %v921, %v2149
        %v2278 = vmul.f32 %v1112, %v2150
        %v2279 = vmul.f32 %v1114, %v2151
        %v2280 = vmul.f32 %v925, %v2152
        %v2281 = vmul.f32 %v927, %v2153
        %v2282 = vmul.f32 %v1118, %v2154
        %v2283 = vmul.f32 %v1120, %v2155
        %v2284 = vmul.f32 %v929, %v2156
        %v2285 = vmul.f32 %v931, %v2157
        %v2286 = vmul.f32 %v1122, %v2158
        %v2287 = vmul.f32 %v1124, %v2159
        %v2288 = vmul.f32 %v935, %v2160
        %v2289 = vmul.f32 %v937, %v2161
        %v2290 = vmul.f32 %v1128, %v2162
        %v2291 = vmul.f32 %v1130, %v2163
        %v2292 = vmul.f32 %v939, %v2164
        %v2293 = vmul.f32 %v941, %v2165
        %v2294 = vmul.f32 %v1132, %v2166
        %v2295 = vmul.f32 %v1134, %v2167
        %v2296 = vmul.f32 %v945, %v2168
        %v2297 = vmul.f32 %v947, %v2169
        %v2298 = vmul.f32 %v1138, %v2170
        %v2299 = vmul.f32 %v1140, %v2171
        %v2300 = vmul.f32 %v949, %v2172
        %v2301 = vmul.f32 %v951, %v2173
        %v2302 = vmul.f32 %v1142, %v2174
        %v2303 = vmul.f32 %v1144, %v2175
        %v2304 = vmul.f32 %v955, %v2176
        %v2305 = vmul.f32 %v957, %v2177
        %v2306 = vmul.f32 %v1148, %v2178
        %v2307 = vmul.f32 %v1150, %v2179
        %v2308 = vmul.f32 %v959, %v2180
        %v2309 = vmul.f32 %v961, %v2181
        %v2310 = vmul.f32 %v1152, %v2182
        %v2311 = vmul.f32 %v1154, %v2183
        %v2312 = vmul.f32 %v965, %v2184
        %v2313 = vmul.f32 %v967, %v2185
        %v2314 = vmul.f32 %v1158, %v2186
        %v2315 = vmul.f32 %v1160, %v2187
        %v2316 = vmul.f32 %v969, %v2188
        %v2317 = vmul.f32 %v971, %v2189
        %v2318 = vmul.f32 %v1162, %v2190
        %v2319 = vmul.f32 %v1164, %v2191
        %v2320 = vmul.f32 %v975, %v2192
        %v2321 = vmul.f32 %v977, %v2193
        %v2322 = vmul.f32 %v1168, %v2194
        %v2323 = vmul.f32 %v1170, %v2195
        %v2324 = vmul.f32 %v979, %v2196
        %v2325 = vmul.f32 %v981, %v2197
        %v2326 = vmul.f32 %v1172, %v2198
        %v2327 = vmul.f32 %v1174, %v2199
        %v2328 = vpack.c.bf16 %v2204, %v2200
        %v2329 = vpack.c.bf16 %v2205, %v2201
        %v2330 = vpack.c.bf16 %v2206, %v2202
        %v2331 = vpack.c.bf16 %v2207, %v2203
        %v2332 = vpack.c.bf16 %v2212, %v2208
        %v2333 = vpack.c.bf16 %v2213, %v2209
        %v2334 = vpack.c.bf16 %v2214, %v2210
        %v2335 = vpack.c.bf16 %v2215, %v2211
        %v2336 = vpack.c.bf16 %v2220, %v2216
        %v2337 = vpack.c.bf16 %v2221, %v2217
        %v2338 = vpack.c.bf16 %v2222, %v2218
        %v2339 = vpack.c.bf16 %v2223, %v2219
        %v2340 = vpack.c.bf16 %v2228, %v2224
        %v2341 = vpack.c.bf16 %v2229, %v2225
        %v2342 = vpack.c.bf16 %v2230, %v2226
        %v2343 = vpack.c.bf16 %v2231, %v2227
        %v2344 = vpack.c.bf16 %v2236, %v2232
        %v2345 = vpack.c.bf16 %v2237, %v2233
        %v2346 = vpack.c.bf16 %v2238, %v2234
        %v2347 = vpack.c.bf16 %v2239, %v2235
        %v2348 = vpack.c.bf16 %v2244, %v2240
        %v2349 = vpack.c.bf16 %v2245, %v2241
        %v2350 = vpack.c.bf16 %v2246, %v2242
        %v2351 = vpack.c.bf16 %v2247, %v2243
        %v2352 = vpack.c.bf16 %v2252, %v2248
        %v2353 = vpack.c.bf16 %v2253, %v2249
        %v2354 = vpack.c.bf16 %v2254, %v2250
        %v2355 = vpack.c.bf16 %v2255, %v2251
        %v2356 = vpack.c.bf16 %v2260, %v2256
        %v2357 = vpack.c.bf16 %v2261, %v2257
        %v2358 = vpack.c.bf16 %v2262, %v2258
        %v2359 = vpack.c.bf16 %v2263, %v2259
        %v2360 = vpack.c.bf16 %v2268, %v2264
        %v2361 = vpack.c.bf16 %v2269, %v2265
        %v2362 = vpack.c.bf16 %v2270, %v2266
        %v2363 = vpack.c.bf16 %v2271, %v2267
        %v2364 = vpack.c.bf16 %v2276, %v2272
        %v2365 = vpack.c.bf16 %v2277, %v2273
        %v2366 = vpack.c.bf16 %v2278, %v2274
        %v2367 = vpack.c.bf16 %v2279, %v2275
        %v2368 = vpack.c.bf16 %v2284, %v2280
        %v2369 = vpack.c.bf16 %v2285, %v2281
        %v2370 = vpack.c.bf16 %v2286, %v2282
        %v2371 = vpack.c.bf16 %v2287, %v2283
        %v2372 = vpack.c.bf16 %v2292, %v2288
        %v2373 = vpack.c.bf16 %v2293, %v2289
        %v2374 = vpack.c.bf16 %v2294, %v2290
        %v2375 = vpack.c.bf16 %v2295, %v2291
        %v2376 = vpack.c.bf16 %v2300, %v2296
        %v2377 = vpack.c.bf16 %v2301, %v2297
        %v2378 = vpack.c.bf16 %v2302, %v2298
        %v2379 = vpack.c.bf16 %v2303, %v2299
        %v2380 = vpack.c.bf16 %v2308, %v2304
        %v2381 = vpack.c.bf16 %v2309, %v2305
        %v2382 = vpack.c.bf16 %v2310, %v2306
        %v2383 = vpack.c.bf16 %v2311, %v2307
        %v2384 = vpack.c.bf16 %v2316, %v2312
        %v2385 = vpack.c.bf16 %v2317, %v2313
        %v2386 = vpack.c.bf16 %v2318, %v2314
        %v2387 = vpack.c.bf16 %v2319, %v2315
        %v2388 = vpack.c.bf16 %v2324, %v2320
        %v2389 = vpack.c.bf16 %v2325, %v2321
        %v2390 = vpack.c.bf16 %v2326, %v2322
        %v2391 = vpack.c.bf16 %v2327, %v2323
        %v2392 = vld [vmem:[#allocation8] sm:$0xff]
        %v2393 = vld [vmem:[#allocation8 + $0x8] sm:$0xff]
        %v2394 = vld [vmem:[#allocation8 + $0x10] sm:$0xff]
        %v2395 = vld [vmem:[#allocation8 + $0x18] sm:$0xff]
        %v2396 = vld [vmem:[#allocation8 + $0x20] sm:$0xff]
        %v2397 = vld [vmem:[#allocation8 + $0x28] sm:$0xff]
        %v2398 = vld [vmem:[#allocation8 + $0x30] sm:$0xff]
        %v2399 = vld [vmem:[#allocation8 + $0x38] sm:$0xff]
        %v2400 = vld [vmem:[#allocation8 + $0x40] sm:$0xff]
        %v2401 = vld [vmem:[#allocation8 + $0x48] sm:$0xff]
        %v2402 = vld [vmem:[#allocation8 + $0x50] sm:$0xff]
        %v2403 = vld [vmem:[#allocation8 + $0x58] sm:$0xff]
        %v2404 = vld [vmem:[#allocation8 + $0x60] sm:$0xff]
        %v2405 = vld [vmem:[#allocation8 + $0x68] sm:$0xff]
        %v2406 = vld [vmem:[#allocation8 + $0x70] sm:$0xff]
        %v2407 = vld [vmem:[#allocation8 + $0x78] sm:$0xff]
        %v2408 = vld [vmem:[#allocation8 + $0x80] sm:$0xff]
        %v2409 = vld [vmem:[#allocation8 + $0x88] sm:$0xff]
        %v2410 = vld [vmem:[#allocation8 + $0x90] sm:$0xff]
        %v2411 = vld [vmem:[#allocation8 + $0x98] sm:$0xff]
        %v2412 = vld [vmem:[#allocation8 + $0xa0] sm:$0xff]
        %v2413 = vld [vmem:[#allocation8 + $0xa8] sm:$0xff]
        %v2414 = vld [vmem:[#allocation8 + $0xb0] sm:$0xff]
        %v2415 = vld [vmem:[#allocation8 + $0xb8] sm:$0xff]
        %v2416 = vld [vmem:[#allocation8 + $0xc0] sm:$0xff]
        %v2417 = vld [vmem:[#allocation8 + $0xc8] sm:$0xff]
        %v2418 = vld [vmem:[#allocation8 + $0xd0] sm:$0xff]
        %v2419 = vld [vmem:[#allocation8 + $0xd8] sm:$0xff]
        %v2420 = vld [vmem:[#allocation8 + $0xe0] sm:$0xff]
        %v2421 = vld [vmem:[#allocation8 + $0xe8] sm:$0xff]
        %v2422 = vld [vmem:[#allocation8 + $0xf0] sm:$0xff]
        %v2423 = vld [vmem:[#allocation8 + $0xf8] sm:$0xff]
        %v2424 = vld [vmem:[#allocation8 + $0x100] sm:$0xff]
        %v2425 = vld [vmem:[#allocation8 + $0x108] sm:$0xff]
        %v2426 = vld [vmem:[#allocation8 + $0x110] sm:$0xff]
        %v2427 = vld [vmem:[#allocation8 + $0x118] sm:$0xff]
        %v2428 = vld [vmem:[#allocation8 + $0x120] sm:$0xff]
        %v2429 = vld [vmem:[#allocation8 + $0x128] sm:$0xff]
        %v2430 = vld [vmem:[#allocation8 + $0x130] sm:$0xff]
        %v2431 = vld [vmem:[#allocation8 + $0x138] sm:$0xff]
        %v2432 = vld [vmem:[#allocation8 + $0x140] sm:$0xff]
        %v2433 = vld [vmem:[#allocation8 + $0x148] sm:$0xff]
        %v2434 = vld [vmem:[#allocation8 + $0x150] sm:$0xff]
        %v2435 = vld [vmem:[#allocation8 + $0x158] sm:$0xff]
        %v2436 = vld [vmem:[#allocation8 + $0x160] sm:$0xff]
        %v2437 = vld [vmem:[#allocation8 + $0x168] sm:$0xff]
        %v2438 = vld [vmem:[#allocation8 + $0x170] sm:$0xff]
        %v2439 = vld [vmem:[#allocation8 + $0x178] sm:$0xff]
        %v2440 = vld [vmem:[#allocation8 + $0x180] sm:$0xff]
        %v2441 = vld [vmem:[#allocation8 + $0x188] sm:$0xff]
        %v2442 = vld [vmem:[#allocation8 + $0x190] sm:$0xff]
        %v2443 = vld [vmem:[#allocation8 + $0x198] sm:$0xff]
        %v2444 = vld [vmem:[#allocation8 + $0x1a0] sm:$0xff]
        %v2445 = vld [vmem:[#allocation8 + $0x1a8] sm:$0xff]
        %v2446 = vld [vmem:[#allocation8 + $0x1b0] sm:$0xff]
        %v2447 = vld [vmem:[#allocation8 + $0x1b8] sm:$0xff]
        %v2448 = vld [vmem:[#allocation8 + $0x1c0] sm:$0xff]
        %v2449 = vld [vmem:[#allocation8 + $0x1c8] sm:$0xff]
        %v2450 = vld [vmem:[#allocation8 + $0x1d0] sm:$0xff]
        %v2451 = vld [vmem:[#allocation8 + $0x1d8] sm:$0xff]
        %v2452 = vld [vmem:[#allocation8 + $0x1e0] sm:$0xff]
        %v2453 = vld [vmem:[#allocation8 + $0x1e8] sm:$0xff]
        %v2454 = vld [vmem:[#allocation8 + $0x1f0] sm:$0xff]
        %v2455 = vld [vmem:[#allocation8 + $0x1f8] sm:$0xff]
        %v2456 = vld [vmem:[%s4] sm:$0x3]
        %v2458 = vlaneseq
        %v2459 = vshrl.u32 %v2458, 7
        %v2460 = vsub.s32 0, %v2459
        %v2461 = vrot.slane %v2456, %v2460
        %v2462 = vlaneseq
        %v2463 = vshrl.u32 %v2462, 7
        %v2464 = vsub.s32 1, %v2463
        %v2465 = vrot.slane %v2456, %v2464
        %v2532 = vunpack.c.l.b16 %v2392
        %v2533 = vunpack.c.h.b16 %v2392
        %v2534 = vunpack.c.l.b16 %v2393
        %v2535 = vunpack.c.h.b16 %v2393
        %v2536 = vunpack.c.l.b16 %v2394
        %v2537 = vunpack.c.h.b16 %v2394
        %v2538 = vunpack.c.l.b16 %v2395
        %v2539 = vunpack.c.h.b16 %v2395
        %v2540 = vunpack.c.l.b16 %v2396
        %v2541 = vunpack.c.h.b16 %v2396
        %v2542 = vunpack.c.l.b16 %v2397
        %v2543 = vunpack.c.h.b16 %v2397
        %v2544 = vunpack.c.l.b16 %v2398
        %v2545 = vunpack.c.h.b16 %v2398
        %v2546 = vunpack.c.l.b16 %v2399
        %v2547 = vunpack.c.h.b16 %v2399
        %v2548 = vunpack.c.l.b16 %v2400
        %v2549 = vunpack.c.h.b16 %v2400
        %v2550 = vunpack.c.l.b16 %v2401
        %v2551 = vunpack.c.h.b16 %v2401
        %v2552 = vunpack.c.l.b16 %v2402
        %v2553 = vunpack.c.h.b16 %v2402
        %v2554 = vunpack.c.l.b16 %v2403
        %v2555 = vunpack.c.h.b16 %v2403
        %v2556 = vunpack.c.l.b16 %v2404
        %v2557 = vunpack.c.h.b16 %v2404
        %v2558 = vunpack.c.l.b16 %v2405
        %v2559 = vunpack.c.h.b16 %v2405
        %v2560 = vunpack.c.l.b16 %v2406
        %v2561 = vunpack.c.h.b16 %v2406
        %v2562 = vunpack.c.l.b16 %v2407
        %v2563 = vunpack.c.h.b16 %v2407
        %v2564 = vunpack.c.l.b16 %v2408
        %v2565 = vunpack.c.h.b16 %v2408
        %v2566 = vunpack.c.l.b16 %v2409
        %v2567 = vunpack.c.h.b16 %v2409
        %v2568 = vunpack.c.l.b16 %v2410
        %v2569 = vunpack.c.h.b16 %v2410
        %v2570 = vunpack.c.l.b16 %v2411
        %v2571 = vunpack.c.h.b16 %v2411
        %v2572 = vunpack.c.l.b16 %v2412
        %v2573 = vunpack.c.h.b16 %v2412
        %v2574 = vunpack.c.l.b16 %v2413
        %v2575 = vunpack.c.h.b16 %v2413
        %v2576 = vunpack.c.l.b16 %v2414
        %v2577 = vunpack.c.h.b16 %v2414
        %v2578 = vunpack.c.l.b16 %v2415
        %v2579 = vunpack.c.h.b16 %v2415
        %v2580 = vunpack.c.l.b16 %v2416
        %v2581 = vunpack.c.h.b16 %v2416
        %v2582 = vunpack.c.l.b16 %v2417
        %v2583 = vunpack.c.h.b16 %v2417
        %v2584 = vunpack.c.l.b16 %v2418
        %v2585 = vunpack.c.h.b16 %v2418
        %v2586 = vunpack.c.l.b16 %v2419
        %v2587 = vunpack.c.h.b16 %v2419
        %v2588 = vunpack.c.l.b16 %v2420
        %v2589 = vunpack.c.h.b16 %v2420
        %v2590 = vunpack.c.l.b16 %v2421
        %v2591 = vunpack.c.h.b16 %v2421
        %v2592 = vunpack.c.l.b16 %v2422
        %v2593 = vunpack.c.h.b16 %v2422
        %v2594 = vunpack.c.l.b16 %v2423
        %v2595 = vunpack.c.h.b16 %v2423
        %v2596 = vunpack.c.l.b16 %v2424
        %v2597 = vunpack.c.h.b16 %v2424
        %v2598 = vunpack.c.l.b16 %v2425
        %v2599 = vunpack.c.h.b16 %v2425
        %v2600 = vunpack.c.l.b16 %v2426
        %v2601 = vunpack.c.h.b16 %v2426
        %v2602 = vunpack.c.l.b16 %v2427
        %v2603 = vunpack.c.h.b16 %v2427
        %v2604 = vunpack.c.l.b16 %v2428
        %v2605 = vunpack.c.h.b16 %v2428
        %v2606 = vunpack.c.l.b16 %v2429
        %v2607 = vunpack.c.h.b16 %v2429
        %v2608 = vunpack.c.l.b16 %v2430
        %v2609 = vunpack.c.h.b16 %v2430
        %v2610 = vunpack.c.l.b16 %v2431
        %v2611 = vunpack.c.h.b16 %v2431
        %v2612 = vunpack.c.l.b16 %v2432
        %v2613 = vunpack.c.h.b16 %v2432
        %v2614 = vunpack.c.l.b16 %v2433
        %v2615 = vunpack.c.h.b16 %v2433
        %v2616 = vunpack.c.l.b16 %v2434
        %v2617 = vunpack.c.h.b16 %v2434
        %v2618 = vunpack.c.l.b16 %v2435
        %v2619 = vunpack.c.h.b16 %v2435
        %v2620 = vunpack.c.l.b16 %v2436
        %v2621 = vunpack.c.h.b16 %v2436
        %v2622 = vunpack.c.l.b16 %v2437
        %v2623 = vunpack.c.h.b16 %v2437
        %v2624 = vunpack.c.l.b16 %v2438
        %v2625 = vunpack.c.h.b16 %v2438
        %v2626 = vunpack.c.l.b16 %v2439
        %v2627 = vunpack.c.h.b16 %v2439
        %v2628 = vunpack.c.l.b16 %v2440
        %v2629 = vunpack.c.h.b16 %v2440
        %v2630 = vunpack.c.l.b16 %v2441
        %v2631 = vunpack.c.h.b16 %v2441
        %v2632 = vunpack.c.l.b16 %v2442
        %v2633 = vunpack.c.h.b16 %v2442
        %v2634 = vunpack.c.l.b16 %v2443
        %v2635 = vunpack.c.h.b16 %v2443
        %v2636 = vunpack.c.l.b16 %v2444
        %v2637 = vunpack.c.h.b16 %v2444
        %v2638 = vunpack.c.l.b16 %v2445
        %v2639 = vunpack.c.h.b16 %v2445
        %v2640 = vunpack.c.l.b16 %v2446
        %v2641 = vunpack.c.h.b16 %v2446
        %v2642 = vunpack.c.l.b16 %v2447
        %v2643 = vunpack.c.h.b16 %v2447
        %v2644 = vunpack.c.l.b16 %v2448
        %v2645 = vunpack.c.h.b16 %v2448
        %v2646 = vunpack.c.l.b16 %v2449
        %v2647 = vunpack.c.h.b16 %v2449
        %v2648 = vunpack.c.l.b16 %v2450
        %v2649 = vunpack.c.h.b16 %v2450
        %v2650 = vunpack.c.l.b16 %v2451
        %v2651 = vunpack.c.h.b16 %v2451
        %v2652 = vunpack.c.l.b16 %v2452
        %v2653 = vunpack.c.h.b16 %v2452
        %v2654 = vunpack.c.l.b16 %v2453
        %v2655 = vunpack.c.h.b16 %v2453
        %v2656 = vunpack.c.l.b16 %v2454
        %v2657 = vunpack.c.h.b16 %v2454
        %v2658 = vunpack.c.l.b16 %v2455
        %v2659 = vunpack.c.h.b16 %v2455
        %v2660 = vpack.c.b16 %v2534, %v2532
        %v2661 = vpack.c.b16 %v2535, %v2533
        %v2662 = vpack.c.b16 %v2538, %v2536
        %v2663 = vpack.c.b16 %v2539, %v2537
        %v2664 = vpack.c.b16 %v2542, %v2540
        %v2665 = vpack.c.b16 %v2543, %v2541
        %v2666 = vpack.c.b16 %v2546, %v2544
        %v2667 = vpack.c.b16 %v2547, %v2545
        %v2668 = vpack.c.b16 %v2550, %v2548
        %v2669 = vpack.c.b16 %v2551, %v2549
        %v2670 = vpack.c.b16 %v2554, %v2552
        %v2671 = vpack.c.b16 %v2555, %v2553
        %v2672 = vpack.c.b16 %v2558, %v2556
        %v2673 = vpack.c.b16 %v2559, %v2557
        %v2674 = vpack.c.b16 %v2562, %v2560
        %v2675 = vpack.c.b16 %v2563, %v2561
        %v2676 = vpack.c.b16 %v2566, %v2564
        %v2677 = vpack.c.b16 %v2567, %v2565
        %v2678 = vpack.c.b16 %v2570, %v2568
        %v2679 = vpack.c.b16 %v2571, %v2569
        %v2680 = vpack.c.b16 %v2574, %v2572
        %v2681 = vpack.c.b16 %v2575, %v2573
        %v2682 = vpack.c.b16 %v2578, %v2576
        %v2683 = vpack.c.b16 %v2579, %v2577
        %v2684 = vpack.c.b16 %v2582, %v2580
        %v2685 = vpack.c.b16 %v2583, %v2581
        %v2686 = vpack.c.b16 %v2586, %v2584
        %v2687 = vpack.c.b16 %v2587, %v2585
        %v2688 = vpack.c.b16 %v2590, %v2588
        %v2689 = vpack.c.b16 %v2591, %v2589
        %v2690 = vpack.c.b16 %v2594, %v2592
        %v2691 = vpack.c.b16 %v2595, %v2593
        %v2692 = vpack.c.b16 %v2598, %v2596
        %v2693 = vpack.c.b16 %v2599, %v2597
        %v2694 = vpack.c.b16 %v2602, %v2600
        %v2695 = vpack.c.b16 %v2603, %v2601
        %v2696 = vpack.c.b16 %v2606, %v2604
        %v2697 = vpack.c.b16 %v2607, %v2605
        %v2698 = vpack.c.b16 %v2610, %v2608
        %v2699 = vpack.c.b16 %v2611, %v2609
        %v2700 = vpack.c.b16 %v2614, %v2612
        %v2701 = vpack.c.b16 %v2615, %v2613
        %v2702 = vpack.c.b16 %v2618, %v2616
        %v2703 = vpack.c.b16 %v2619, %v2617
        %v2704 = vpack.c.b16 %v2622, %v2620
        %v2705 = vpack.c.b16 %v2623, %v2621
        %v2706 = vpack.c.b16 %v2626, %v2624
        %v2707 = vpack.c.b16 %v2627, %v2625
        %v2708 = vpack.c.b16 %v2630, %v2628
        %v2709 = vpack.c.b16 %v2631, %v2629
        %v2710 = vpack.c.b16 %v2634, %v2632
        %v2711 = vpack.c.b16 %v2635, %v2633
        %v2712 = vpack.c.b16 %v2638, %v2636
        %v2713 = vpack.c.b16 %v2639, %v2637
        %v2714 = vpack.c.b16 %v2642, %v2640
        %v2715 = vpack.c.b16 %v2643, %v2641
        %v2716 = vpack.c.b16 %v2646, %v2644
        %v2717 = vpack.c.b16 %v2647, %v2645
        %v2718 = vpack.c.b16 %v2650, %v2648
        %v2719 = vpack.c.b16 %v2651, %v2649
        %v2720 = vpack.c.b16 %v2654, %v2652
        %v2721 = vpack.c.b16 %v2655, %v2653
        %v2722 = vpack.c.b16 %v2658, %v2656
        %v2723 = vpack.c.b16 %v2659, %v2657
        %2788 = vmatprep.subr.bf16.mxu0 %v2675
        %2789 = vmatpush1.bf16.msra.mxu0 %v2674
        %2790 = vmatprep.subr.bf16.mxu0 %v2673
        %2791 = vmatpush1.bf16.msra.mxu0 %v2672
        %2792 = vmatprep.subr.bf16.mxu0 %v2671
        %2793 = vmatpush1.bf16.msra.mxu0 %v2670
        %2794 = vmatprep.subr.bf16.mxu0 %v2669
        %2795 = vmatpush1.bf16.msra.mxu0 %v2668
        %2796 = vmatprep.subr.bf16.mxu0 %v2667
        %2797 = vmatpush1.bf16.msra.mxu0 %v2666
        %2798 = vmatprep.subr.bf16.mxu0 %v2665
        %2799 = vmatpush1.bf16.msra.mxu0 %v2664
        %2800 = vmatprep.subr.bf16.mxu0 %v2663
        %2801 = vmatpush1.bf16.msra.mxu0 %v2662
        %2802 = vmatprep.subr.bf16.mxu0 %v2661
        %2803 = vmatpush1.bf16.msra.mxu0 %v2660
        %2804 = vmatprep.subr.bf16.mxu0 %v2691
        %2805 = vmatpush2.bf16.msra.mxu0 %v2690
        %2806 = vmatprep.subr.bf16.mxu0 %v2689
        %2807 = vmatpush2.bf16.msra.mxu0 %v2688
        %2808 = vmatprep.subr.bf16.mxu0 %v2687
        %2809 = vmatpush2.bf16.msra.mxu0 %v2686
        %2810 = vmatprep.subr.bf16.mxu0 %v2685
        %2811 = vmatpush2.bf16.msra.mxu0 %v2684
        %2812 = vmatprep.subr.bf16.mxu0 %v2683
        %2813 = vmatpush2.bf16.msra.mxu0 %v2682
        %2814 = vmatprep.subr.bf16.mxu0 %v2681
        %2815 = vmatpush2.bf16.msra.mxu0 %v2680
        %2816 = vmatprep.subr.bf16.mxu0 %v2679
        %2817 = vmatpush2.bf16.msra.mxu0 %v2678
        %2818 = vmatprep.subr.bf16.mxu0 %v2677
        %2819 = vmatpush2.bf16.msra.mxu0 %v2676
        %2820 = vmatprep.mubr.bf16.mxu0 %v2329
        %2821 = vmatmul.mubr.bf16.gmra.mxu0 %v2328
        %v2822 = vpop.f32.mrf.mxu0
        %v2823 = vadd.f32 %v2461, %v2822
        %v2824 = vpop.f32.mrf.mxu0
        %v2825 = vadd.f32 %v2465, %v2824
        %v2826 = vpop.f32.mrf.mxu0
        %v2827 = vadd.f32 %v2461, %v2826
        %v2828 = vpop.f32.mrf.mxu0
        %v2829 = vadd.f32 %v2465, %v2828
        %2830 = vmatprep.mubr.bf16.mxu0 %v2333
        %2831 = vmatmul.mubr.bf16.gmra.mxu0 %v2332
        %v2832 = vpop.f32.mrf.mxu0
        %v2833 = vadd.f32 %v2461, %v2832
        %v2834 = vpop.f32.mrf.mxu0
        %v2835 = vadd.f32 %v2465, %v2834
        %v2836 = vpop.f32.mrf.mxu0
        %v2837 = vadd.f32 %v2461, %v2836
        %v2838 = vpop.f32.mrf.mxu0
        %v2839 = vadd.f32 %v2465, %v2838
        %2840 = vmatprep.mubr.bf16.mxu0 %v2337
        %2841 = vmatmul.mubr.bf16.gmra.mxu0 %v2336
        %v2842 = vpop.f32.mrf.mxu0
        %v2843 = vadd.f32 %v2461, %v2842
        %v2844 = vpop.f32.mrf.mxu0
        %v2845 = vadd.f32 %v2465, %v2844
        %v2846 = vpop.f32.mrf.mxu0
        %v2847 = vadd.f32 %v2461, %v2846
        %v2848 = vpop.f32.mrf.mxu0
        %v2849 = vadd.f32 %v2465, %v2848
        %2850 = vmatprep.mubr.bf16.mxu0 %v2341
        %2851 = vmatmul.mubr.bf16.gmra.mxu0 %v2340
        %v2852 = vpop.f32.mrf.mxu0
        %v2853 = vadd.f32 %v2461, %v2852
        %v2854 = vpop.f32.mrf.mxu0
        %v2855 = vadd.f32 %v2465, %v2854
        %v2856 = vpop.f32.mrf.mxu0
        %v2857 = vadd.f32 %v2461, %v2856
        %v2858 = vpop.f32.mrf.mxu0
        %v2859 = vadd.f32 %v2465, %v2858
        %2860 = vmatprep.mubr.bf16.mxu0 %v2345
        %2861 = vmatmul.mubr.bf16.gmra.mxu0 %v2344
        %v2862 = vpop.f32.mrf.mxu0
        %v2863 = vadd.f32 %v2461, %v2862
        %v2864 = vpop.f32.mrf.mxu0
        %v2865 = vadd.f32 %v2465, %v2864
        %v2866 = vpop.f32.mrf.mxu0
        %v2867 = vadd.f32 %v2461, %v2866
        %v2868 = vpop.f32.mrf.mxu0
        %v2869 = vadd.f32 %v2465, %v2868
        %2870 = vmatprep.mubr.bf16.mxu0 %v2349
        %2871 = vmatmul.mubr.bf16.gmra.mxu0 %v2348
        %v2872 = vpop.f32.mrf.mxu0
        %v2873 = vadd.f32 %v2461, %v2872
        %v2874 = vpop.f32.mrf.mxu0
        %v2875 = vadd.f32 %v2465, %v2874
        %v2876 = vpop.f32.mrf.mxu0
        %v2877 = vadd.f32 %v2461, %v2876
        %v2878 = vpop.f32.mrf.mxu0
        %v2879 = vadd.f32 %v2465, %v2878
        %2880 = vmatprep.mubr.bf16.mxu0 %v2353
        %2881 = vmatmul.mubr.bf16.gmra.mxu0 %v2352
        %v2882 = vpop.f32.mrf.mxu0
        %v2883 = vadd.f32 %v2461, %v2882
        %v2884 = vpop.f32.mrf.mxu0
        %v2885 = vadd.f32 %v2465, %v2884
        %v2886 = vpop.f32.mrf.mxu0
        %v2887 = vadd.f32 %v2461, %v2886
        %v2888 = vpop.f32.mrf.mxu0
        %v2889 = vadd.f32 %v2465, %v2888
        %2890 = vmatprep.mubr.bf16.mxu0 %v2357
        %2891 = vmatmul.mubr.bf16.gmra.mxu0 %v2356
        %v2892 = vpop.f32.mrf.mxu0
        %v2893 = vadd.f32 %v2461, %v2892
        %v2894 = vpop.f32.mrf.mxu0
        %v2895 = vadd.f32 %v2465, %v2894
        %v2896 = vpop.f32.mrf.mxu0
        %v2897 = vadd.f32 %v2461, %v2896
        %v2898 = vpop.f32.mrf.mxu0
        %v2899 = vadd.f32 %v2465, %v2898
        %2900 = vmatprep.mubr.bf16.mxu0 %v2361
        %2901 = vmatmul.mubr.bf16.gmra.mxu0 %v2360
        %v2902 = vpop.f32.mrf.mxu0
        %v2903 = vadd.f32 %v2461, %v2902
        %v2904 = vpop.f32.mrf.mxu0
        %v2905 = vadd.f32 %v2465, %v2904
        %v2906 = vpop.f32.mrf.mxu0
        %v2907 = vadd.f32 %v2461, %v2906
        %v2908 = vpop.f32.mrf.mxu0
        %v2909 = vadd.f32 %v2465, %v2908
        %2910 = vmatprep.mubr.bf16.mxu0 %v2365
        %2911 = vmatmul.mubr.bf16.gmra.mxu0 %v2364
        %v2912 = vpop.f32.mrf.mxu0
        %v2913 = vadd.f32 %v2461, %v2912
        %v2914 = vpop.f32.mrf.mxu0
        %v2915 = vadd.f32 %v2465, %v2914
        %v2916 = vpop.f32.mrf.mxu0
        %v2917 = vadd.f32 %v2461, %v2916
        %v2918 = vpop.f32.mrf.mxu0
        %v2919 = vadd.f32 %v2465, %v2918
        %2920 = vmatprep.mubr.bf16.mxu0 %v2369
        %2921 = vmatmul.mubr.bf16.gmra.mxu0 %v2368
        %v2922 = vpop.f32.mrf.mxu0
        %v2923 = vadd.f32 %v2461, %v2922
        %v2924 = vpop.f32.mrf.mxu0
        %v2925 = vadd.f32 %v2465, %v2924
        %v2926 = vpop.f32.mrf.mxu0
        %v2927 = vadd.f32 %v2461, %v2926
        %v2928 = vpop.f32.mrf.mxu0
        %v2929 = vadd.f32 %v2465, %v2928
        %2930 = vmatprep.mubr.bf16.mxu0 %v2373
        %2931 = vmatmul.mubr.bf16.gmra.mxu0 %v2372
        %v2932 = vpop.f32.mrf.mxu0
        %v2933 = vadd.f32 %v2461, %v2932
        %v2934 = vpop.f32.mrf.mxu0
        %v2935 = vadd.f32 %v2465, %v2934
        %v2936 = vpop.f32.mrf.mxu0
        %v2937 = vadd.f32 %v2461, %v2936
        %v2938 = vpop.f32.mrf.mxu0
        %v2939 = vadd.f32 %v2465, %v2938
        %2940 = vmatprep.mubr.bf16.mxu0 %v2377
        %2941 = vmatmul.mubr.bf16.gmra.mxu0 %v2376
        %v2942 = vpop.f32.mrf.mxu0
        %v2943 = vadd.f32 %v2461, %v2942
        %v2944 = vpop.f32.mrf.mxu0
        %v2945 = vadd.f32 %v2465, %v2944
        %v2946 = vpop.f32.mrf.mxu0
        %v2947 = vadd.f32 %v2461, %v2946
        %v2948 = vpop.f32.mrf.mxu0
        %v2949 = vadd.f32 %v2465, %v2948
        %2950 = vmatprep.mubr.bf16.mxu0 %v2381
        %2951 = vmatmul.mubr.bf16.gmra.mxu0 %v2380
        %v2952 = vpop.f32.mrf.mxu0
        %v2953 = vadd.f32 %v2461, %v2952
        %v2954 = vpop.f32.mrf.mxu0
        %v2955 = vadd.f32 %v2465, %v2954
        %v2956 = vpop.f32.mrf.mxu0
        %v2957 = vadd.f32 %v2461, %v2956
        %v2958 = vpop.f32.mrf.mxu0
        %v2959 = vadd.f32 %v2465, %v2958
        %2960 = vmatprep.mubr.bf16.mxu0 %v2385
        %2961 = vmatmul.mubr.bf16.gmra.mxu0 %v2384
        %v2962 = vpop.f32.mrf.mxu0
        %v2963 = vadd.f32 %v2461, %v2962
        %v2964 = vpop.f32.mrf.mxu0
        %v2965 = vadd.f32 %v2465, %v2964
        %v2966 = vpop.f32.mrf.mxu0
        %v2967 = vadd.f32 %v2461, %v2966
        %v2968 = vpop.f32.mrf.mxu0
        %v2969 = vadd.f32 %v2465, %v2968
        %2970 = vmatprep.mubr.bf16.mxu0 %v2389
        %2971 = vmatmul.mubr.bf16.gmra.mxu0 %v2388
        %v2972 = vpop.f32.mrf.mxu0
        %v2973 = vadd.f32 %v2461, %v2972
        %v2974 = vpop.f32.mrf.mxu0
        %v2975 = vadd.f32 %v2465, %v2974
        %v2976 = vpop.f32.mrf.mxu0
        %v2977 = vadd.f32 %v2461, %v2976
        %v2978 = vpop.f32.mrf.mxu0
        %v2979 = vadd.f32 %v2465, %v2978
        %2980 = vdwg.mxu0
        %2981 = vmatprep.subr.bf16.mxu0 %v2707
        %2982 = vmatpush1.bf16.msra.mxu0 %v2706
        %2983 = vmatprep.subr.bf16.mxu0 %v2705
        %2984 = vmatpush1.bf16.msra.mxu0 %v2704
        %2985 = vmatprep.subr.bf16.mxu0 %v2703
        %2986 = vmatpush1.bf16.msra.mxu0 %v2702
        %2987 = vmatprep.subr.bf16.mxu0 %v2701
        %2988 = vmatpush1.bf16.msra.mxu0 %v2700
        %2989 = vmatprep.subr.bf16.mxu0 %v2699
        %2990 = vmatpush1.bf16.msra.mxu0 %v2698
        %2991 = vmatprep.subr.bf16.mxu0 %v2697
        %2992 = vmatpush1.bf16.msra.mxu0 %v2696
        %2993 = vmatprep.subr.bf16.mxu0 %v2695
        %2994 = vmatpush1.bf16.msra.mxu0 %v2694
        %2995 = vmatprep.subr.bf16.mxu0 %v2693
        %2996 = vmatpush1.bf16.msra.mxu0 %v2692
        %2997 = vmatprep.subr.bf16.mxu0 %v2723
        %2998 = vmatpush2.bf16.msra.mxu0 %v2722
        %2999 = vmatprep.subr.bf16.mxu0 %v2721
        %3000 = vmatpush2.bf16.msra.mxu0 %v2720
        %3001 = vmatprep.subr.bf16.mxu0 %v2719
        %3002 = vmatpush2.bf16.msra.mxu0 %v2718
        %3003 = vmatprep.subr.bf16.mxu0 %v2717
        %3004 = vmatpush2.bf16.msra.mxu0 %v2716
        %3005 = vmatprep.subr.bf16.mxu0 %v2715
        %3006 = vmatpush2.bf16.msra.mxu0 %v2714
        %3007 = vmatprep.subr.bf16.mxu0 %v2713
        %3008 = vmatpush2.bf16.msra.mxu0 %v2712
        %3009 = vmatprep.subr.bf16.mxu0 %v2711
        %3010 = vmatpush2.bf16.msra.mxu0 %v2710
        %3011 = vmatprep.subr.bf16.mxu0 %v2709
        %3012 = vmatpush2.bf16.msra.mxu0 %v2708
        %3013 = vmatprep.mubr.bf16.mxu0 %v2331
        %3014 = vmatmul.mubr.bf16.gmra.mxu0 %v2330
        %v3015 = vpop.f32.mrf.mxu0
        %v3016 = vadd.f32 %v2823, %v3015
        %v3017 = vpop.f32.mrf.mxu0
        %v3018 = vadd.f32 %v2825, %v3017
        %v3019 = vpop.f32.mrf.mxu0
        %v3020 = vadd.f32 %v2827, %v3019
        %v3021 = vpop.f32.mrf.mxu0
        %v3022 = vadd.f32 %v2829, %v3021
        %3023 = vmatprep.mubr.bf16.mxu0 %v2335
        %3024 = vmatmul.mubr.bf16.gmra.mxu0 %v2334
        %v3025 = vpop.f32.mrf.mxu0
        %v3026 = vadd.f32 %v2833, %v3025
        %v3027 = vpop.f32.mrf.mxu0
        %v3028 = vadd.f32 %v2835, %v3027
        %v3029 = vpop.f32.mrf.mxu0
        %v3030 = vadd.f32 %v2837, %v3029
        %v3031 = vpop.f32.mrf.mxu0
        %v3032 = vadd.f32 %v2839, %v3031
        %3033 = vmatprep.mubr.bf16.mxu0 %v2339
        %3034 = vmatmul.mubr.bf16.gmra.mxu0 %v2338
        %v3035 = vpop.f32.mrf.mxu0
        %v3036 = vadd.f32 %v2843, %v3035
        %v3037 = vpop.f32.mrf.mxu0
        %v3038 = vadd.f32 %v2845, %v3037
        %v3039 = vpop.f32.mrf.mxu0
        %v3040 = vadd.f32 %v2847, %v3039
        %v3041 = vpop.f32.mrf.mxu0
        %v3042 = vadd.f32 %v2849, %v3041
        %3043 = vmatprep.mubr.bf16.mxu0 %v2343
        %3044 = vmatmul.mubr.bf16.gmra.mxu0 %v2342
        %v3045 = vpop.f32.mrf.mxu0
        %v3046 = vadd.f32 %v2853, %v3045
        %v3047 = vpop.f32.mrf.mxu0
        %v3048 = vadd.f32 %v2855, %v3047
        %v3049 = vpop.f32.mrf.mxu0
        %v3050 = vadd.f32 %v2857, %v3049
        %v3051 = vpop.f32.mrf.mxu0
        %v3052 = vadd.f32 %v2859, %v3051
        %3053 = vmatprep.mubr.bf16.mxu0 %v2347
        %3054 = vmatmul.mubr.bf16.gmra.mxu0 %v2346
        %v3055 = vpop.f32.mrf.mxu0
        %v3056 = vadd.f32 %v2863, %v3055
        %v3057 = vpop.f32.mrf.mxu0
        %v3058 = vadd.f32 %v2865, %v3057
        %v3059 = vpop.f32.mrf.mxu0
        %v3060 = vadd.f32 %v2867, %v3059
        %v3061 = vpop.f32.mrf.mxu0
        %v3062 = vadd.f32 %v2869, %v3061
        %3063 = vmatprep.mubr.bf16.mxu0 %v2351
        %3064 = vmatmul.mubr.bf16.gmra.mxu0 %v2350
        %v3065 = vpop.f32.mrf.mxu0
        %v3066 = vadd.f32 %v2873, %v3065
        %v3067 = vpop.f32.mrf.mxu0
        %v3068 = vadd.f32 %v2875, %v3067
        %v3069 = vpop.f32.mrf.mxu0
        %v3070 = vadd.f32 %v2877, %v3069
        %v3071 = vpop.f32.mrf.mxu0
        %v3072 = vadd.f32 %v2879, %v3071
        %3073 = vmatprep.mubr.bf16.mxu0 %v2355
        %3074 = vmatmul.mubr.bf16.gmra.mxu0 %v2354
        %v3075 = vpop.f32.mrf.mxu0
        %v3076 = vadd.f32 %v2883, %v3075
        %v3077 = vpop.f32.mrf.mxu0
        %v3078 = vadd.f32 %v2885, %v3077
        %v3079 = vpop.f32.mrf.mxu0
        %v3080 = vadd.f32 %v2887, %v3079
        %v3081 = vpop.f32.mrf.mxu0
        %v3082 = vadd.f32 %v2889, %v3081
        %3083 = vmatprep.mubr.bf16.mxu0 %v2359
        %3084 = vmatmul.mubr.bf16.gmra.mxu0 %v2358
        %v3085 = vpop.f32.mrf.mxu0
        %v3086 = vadd.f32 %v2893, %v3085
        %v3087 = vpop.f32.mrf.mxu0
        %v3088 = vadd.f32 %v2895, %v3087
        %v3089 = vpop.f32.mrf.mxu0
        %v3090 = vadd.f32 %v2897, %v3089
        %v3091 = vpop.f32.mrf.mxu0
        %v3092 = vadd.f32 %v2899, %v3091
        %3093 = vmatprep.mubr.bf16.mxu0 %v2363
        %3094 = vmatmul.mubr.bf16.gmra.mxu0 %v2362
        %v3095 = vpop.f32.mrf.mxu0
        %v3096 = vadd.f32 %v2903, %v3095
        %v3097 = vpop.f32.mrf.mxu0
        %v3098 = vadd.f32 %v2905, %v3097
        %v3099 = vpop.f32.mrf.mxu0
        %v3100 = vadd.f32 %v2907, %v3099
        %v3101 = vpop.f32.mrf.mxu0
        %v3102 = vadd.f32 %v2909, %v3101
        %3103 = vmatprep.mubr.bf16.mxu0 %v2367
        %3104 = vmatmul.mubr.bf16.gmra.mxu0 %v2366
        %v3105 = vpop.f32.mrf.mxu0
        %v3106 = vadd.f32 %v2913, %v3105
        %v3107 = vpop.f32.mrf.mxu0
        %v3108 = vadd.f32 %v2915, %v3107
        %v3109 = vpop.f32.mrf.mxu0
        %v3110 = vadd.f32 %v2917, %v3109
        %v3111 = vpop.f32.mrf.mxu0
        %v3112 = vadd.f32 %v2919, %v3111
        %3113 = vmatprep.mubr.bf16.mxu0 %v2371
        %3114 = vmatmul.mubr.bf16.gmra.mxu0 %v2370
        %v3115 = vpop.f32.mrf.mxu0
        %v3116 = vadd.f32 %v2923, %v3115
        %v3117 = vpop.f32.mrf.mxu0
        %v3118 = vadd.f32 %v2925, %v3117
        %v3119 = vpop.f32.mrf.mxu0
        %v3120 = vadd.f32 %v2927, %v3119
        %v3121 = vpop.f32.mrf.mxu0
        %v3122 = vadd.f32 %v2929, %v3121
        %3123 = vmatprep.mubr.bf16.mxu0 %v2375
        %3124 = vmatmul.mubr.bf16.gmra.mxu0 %v2374
        %v3125 = vpop.f32.mrf.mxu0
        %v3126 = vadd.f32 %v2933, %v3125
        %v3127 = vpop.f32.mrf.mxu0
        %v3128 = vadd.f32 %v2935, %v3127
        %v3129 = vpop.f32.mrf.mxu0
        %v3130 = vadd.f32 %v2937, %v3129
        %v3131 = vpop.f32.mrf.mxu0
        %v3132 = vadd.f32 %v2939, %v3131
        %3133 = vmatprep.mubr.bf16.mxu0 %v2379
        %3134 = vmatmul.mubr.bf16.gmra.mxu0 %v2378
        %v3135 = vpop.f32.mrf.mxu0
        %v3136 = vadd.f32 %v2943, %v3135
        %v3137 = vpop.f32.mrf.mxu0
        %v3138 = vadd.f32 %v2945, %v3137
        %v3139 = vpop.f32.mrf.mxu0
        %v3140 = vadd.f32 %v2947, %v3139
        %v3141 = vpop.f32.mrf.mxu0
        %v3142 = vadd.f32 %v2949, %v3141
        %3143 = vmatprep.mubr.bf16.mxu0 %v2383
        %3144 = vmatmul.mubr.bf16.gmra.mxu0 %v2382
        %v3145 = vpop.f32.mrf.mxu0
        %v3146 = vadd.f32 %v2953, %v3145
        %v3147 = vpop.f32.mrf.mxu0
        %v3148 = vadd.f32 %v2955, %v3147
        %v3149 = vpop.f32.mrf.mxu0
        %v3150 = vadd.f32 %v2957, %v3149
        %v3151 = vpop.f32.mrf.mxu0
        %v3152 = vadd.f32 %v2959, %v3151
        %3153 = vmatprep.mubr.bf16.mxu0 %v2387
        %3154 = vmatmul.mubr.bf16.gmra.mxu0 %v2386
        %v3155 = vpop.f32.mrf.mxu0
        %v3156 = vadd.f32 %v2963, %v3155
        %v3157 = vpop.f32.mrf.mxu0
        %v3158 = vadd.f32 %v2965, %v3157
        %v3159 = vpop.f32.mrf.mxu0
        %v3160 = vadd.f32 %v2967, %v3159
        %v3161 = vpop.f32.mrf.mxu0
        %v3162 = vadd.f32 %v2969, %v3161
        %3163 = vmatprep.mubr.bf16.mxu0 %v2391
        %3164 = vmatmul.mubr.bf16.gmra.mxu0 %v2390
        %v3165 = vpop.f32.mrf.mxu0
        %v3166 = vadd.f32 %v2973, %v3165
        %v3167 = vpop.f32.mrf.mxu0
        %v3168 = vadd.f32 %v2975, %v3167
        %v3169 = vpop.f32.mrf.mxu0
        %v3170 = vadd.f32 %v2977, %v3169
        %v3171 = vpop.f32.mrf.mxu0
        %v3172 = vadd.f32 %v2979, %v3171
        %3173 = vdwg.mxu0
        %3174 = vst [vmem:[%s285] sm:$0xff] %v3016
        %3175 = vst [vmem:[%s285 + $0x8] sm:$0xff] %v3018
        %3176 = vst [vmem:[%s285 + $0x10] sm:$0xff] %v3020
        %3177 = vst [vmem:[%s285 + $0x18] sm:$0xff] %v3022
        %3178 = vst [vmem:[%s285 + $0x20] sm:$0xff] %v3026
        %3179 = vst [vmem:[%s285 + $0x28] sm:$0xff] %v3028
        %3180 = vst [vmem:[%s285 + $0x30] sm:$0xff] %v3030
        %3181 = vst [vmem:[%s285 + $0x38] sm:$0xff] %v3032
        %3182 = vst [vmem:[%s285 + $0x40] sm:$0xff] %v3036
        %3183 = vst [vmem:[%s285 + $0x48] sm:$0xff] %v3038
        %3184 = vst [vmem:[%s285 + $0x50] sm:$0xff] %v3040
        %3185 = vst [vmem:[%s285 + $0x58] sm:$0xff] %v3042
        %3186 = vst [vmem:[%s285 + $0x60] sm:$0xff] %v3046
        %3187 = vst [vmem:[%s285 + $0x68] sm:$0xff] %v3048
        %3188 = vst [vmem:[%s285 + $0x70] sm:$0xff] %v3050
        %3189 = vst [vmem:[%s285 + $0x78] sm:$0xff] %v3052
        %3190 = vst [vmem:[%s285 + $0x80] sm:$0xff] %v3056
        %3191 = vst [vmem:[%s285 + $0x88] sm:$0xff] %v3058
        %3192 = vst [vmem:[%s285 + $0x90] sm:$0xff] %v3060
        %3193 = vst [vmem:[%s285 + $0x98] sm:$0xff] %v3062
        %3194 = vst [vmem:[%s285 + $0xa0] sm:$0xff] %v3066
        %3195 = vst [vmem:[%s285 + $0xa8] sm:$0xff] %v3068
        %3196 = vst [vmem:[%s285 + $0xb0] sm:$0xff] %v3070
        %3197 = vst [vmem:[%s285 + $0xb8] sm:$0xff] %v3072
        %3198 = vst [vmem:[%s285 + $0xc0] sm:$0xff] %v3076
        %3199 = vst [vmem:[%s285 + $0xc8] sm:$0xff] %v3078
        %3200 = vst [vmem:[%s285 + $0xd0] sm:$0xff] %v3080
        %3201 = vst [vmem:[%s285 + $0xd8] sm:$0xff] %v3082
        %3202 = vst [vmem:[%s285 + $0xe0] sm:$0xff] %v3086
        %3203 = vst [vmem:[%s285 + $0xe8] sm:$0xff] %v3088
        %3204 = vst [vmem:[%s285 + $0xf0] sm:$0xff] %v3090
        %3205 = vst [vmem:[%s285 + $0xf8] sm:$0xff] %v3092
        %3206 = vst [vmem:[%s285 + $0x100] sm:$0xff] %v3096
        %3207 = vst [vmem:[%s285 + $0x108] sm:$0xff] %v3098
        %3208 = vst [vmem:[%s285 + $0x110] sm:$0xff] %v3100
        %3209 = vst [vmem:[%s285 + $0x118] sm:$0xff] %v3102
        %3210 = vst [vmem:[%s285 + $0x120] sm:$0xff] %v3106
        %3211 = vst [vmem:[%s285 + $0x128] sm:$0xff] %v3108
        %3212 = vst [vmem:[%s285 + $0x130] sm:$0xff] %v3110
        %3213 = vst [vmem:[%s285 + $0x138] sm:$0xff] %v3112
        %3214 = vst [vmem:[%s285 + $0x140] sm:$0xff] %v3116
        %3215 = vst [vmem:[%s285 + $0x148] sm:$0xff] %v3118
        %3216 = vst [vmem:[%s285 + $0x150] sm:$0xff] %v3120
        %3217 = vst [vmem:[%s285 + $0x158] sm:$0xff] %v3122
        %3218 = vst [vmem:[%s285 + $0x160] sm:$0xff] %v3126
        %3219 = vst [vmem:[%s285 + $0x168] sm:$0xff] %v3128
        %3220 = vst [vmem:[%s285 + $0x170] sm:$0xff] %v3130
        %3221 = vst [vmem:[%s285 + $0x178] sm:$0xff] %v3132
        %3222 = vst [vmem:[%s285 + $0x180] sm:$0xff] %v3136
        %3223 = vst [vmem:[%s285 + $0x188] sm:$0xff] %v3138
        %3224 = vst [vmem:[%s285 + $0x190] sm:$0xff] %v3140
        %3225 = vst [vmem:[%s285 + $0x198] sm:$0xff] %v3142
        %3226 = vst [vmem:[%s285 + $0x1a0] sm:$0xff] %v3146
        %3227 = vst [vmem:[%s285 + $0x1a8] sm:$0xff] %v3148
        %3228 = vst [vmem:[%s285 + $0x1b0] sm:$0xff] %v3150
        %3229 = vst [vmem:[%s285 + $0x1b8] sm:$0xff] %v3152
        %3230 = vst [vmem:[%s285 + $0x1c0] sm:$0xff] %v3156
        %3231 = vst [vmem:[%s285 + $0x1c8] sm:$0xff] %v3158
        %3232 = vst [vmem:[%s285 + $0x1d0] sm:$0xff] %v3160
        %3233 = vst [vmem:[%s285 + $0x1d8] sm:$0xff] %v3162
        %3234 = vst [vmem:[%s285 + $0x1e0] sm:$0xff] %v3166
        %3235 = vst [vmem:[%s285 + $0x1e8] sm:$0xff] %v3168
        %3236 = vst [vmem:[%s285 + $0x1f0] sm:$0xff] %v3170
        %3237 = vst [vmem:[%s285 + $0x1f8] sm:$0xff] %v3172
        %s3238 = sand.u32 %s142, 1
        %s3239 = scalar_lea.sflag [#allocation4], %s3238
        %s3240 = sand.u32 %s142, 1
        %s3241 = smul.addr %s3240, 512
        %s3242 = scalar_lea.vmem [#allocation10], %s3241
        // Predicated region
        $region57: #{tpu_custom_call.1} parent=39 // pred_check
          %p3243 = pneg %p152
        $region58: #{tpu_custom_call.1} parent=39 // pred_check_branch
          %3245 = sbr.rel (%p3243) target = $region60
        $region59: #{tpu_custom_call.1} parent=39 // pred_region
          %s3246 = smul.u32 32, %s24
          %s3248 = ssub.s32 8192, 8192
          %3249 = vsyncadd %s3239, %s3248
          %s3250 = smul.addr %s3246, 2
          %s3251 = smul.addr %s3250, 128
          %s3252 = scalar_lea.hbm %s5, %s3251
          %s3253 = sshll.u32 %s3242, 4
          %s3254 = int_to_ptr.vmem [resolvable:$true] %s3253
          %3259 = dma.vmem_to_hbm [thread:$0]  %s3254, 8192, %s3252, %s3239, 256, 256, 16
        $region60: #{tpu_custom_call.1} parent=39 // pred_fallthru
          _
      $region40: #{tpu_custom_call.1} parent=5 // pred_fallthru
        _
      %p3260 = scmp.le.s32.totalorder 2, %s19
      // Predicated region
      $region61: #{tpu_custom_call.1} parent=5 // pred_check
        %p3261 = pneg %p3260
      $region62: #{tpu_custom_call.1} parent=5 // pred_check_branch
        %3263 = sbr.rel (%p3261) target = $region64
      $region63: #{tpu_custom_call.1} parent=5 // pred_region
        %s3264 = ssub.s32 %s19, 2
        // Predicated region
        $region65: #{tpu_custom_call.1} parent=63 // pred_check
          %p3265 = pneg %p158
        $region66: #{tpu_custom_call.1} parent=63 // pred_check_branch
          %3267 = sbr.rel (%p3265) target = $region68
        $region67: #{tpu_custom_call.1} parent=63 // pred_region
          %s3268 = sand.u32 %s143, 1
          %s3269 = scalar_lea.sflag [#allocation4], %s3268
          %s3270 = sand.u32 %s143, 1
          %s3271 = smul.addr %s3270, 512
          %s3272 = scalar_lea.vmem [#allocation10], %s3271
          %3273 = dma.done %s3269, 8192
        $region68: #{tpu_custom_call.1} parent=63 // pred_fallthru
          _
      $region64: #{tpu_custom_call.1} parent=5 // pred_fallthru
        _
    $region6: #{tpu_custom_call.1} parent=1 // loop_footer
      %s23 = sadd.s32 1, %s19
    $region7: #{tpu_custom_call.1} parent=1 // loop_footer_branch
      %18 = sbr.rel target = $region3
    $region8: #{tpu_custom_call.1} parent=1 // loop_exit
      _
    %3274 = vsyncpa [#allocation3], 1
    %s3275 = scalar_lea.sflag [#allocation3], 1
    %3276 = vsyncpa %s3275, 1
    %3277 = vsyncpa [#allocation6], 1
    %3278 = vsyncpa [#allocation9], 1
    %3279 = vsyncpa [#allocation4], 1
    %s3280 = scalar_lea.sflag [#allocation4], 1
    %3281 = vsyncpa %s3280, 1

</llo_original>
